<compile_context>
chip_gen: v6e
topology: v6e:2x2x1
jax: 0.10.0
libtpu: 0.0.40
codegen_flags: <defaults>
</compile_context>

<pallas_src>
import functools
import math

import jax
import jax.numpy as jnp
from jax import lax
from jax.experimental import pallas as pl
from jax.experimental.pallas import tpu as pltpu


_MATMUL_DTYPE = jnp.bfloat16   # MXU input dtype (f32 accumulation everywhere)
_LN_EPS = 1e-5


# ----------------------------------------------------------------------------
# helpers
# ----------------------------------------------------------------------------
def _round_up(x, m):
    return ((x + m - 1) // m) * m


def _pick_tile(n, candidates=(512, 256, 128)):
    for cand in candidates:
        if n % cand == 0:
            return cand
    return n


def _pick_row_block(m, group):
    """Row block for the fused MHA kernel: multiple of `group` (attention group size)."""
    if m <= 512:
        return m
    for cand in (512, 256, 128):
        if m % cand == 0 and cand % group == 0:
            return cand
    return m


# ----------------------------------------------------------------------------
# Pallas kernels
# ----------------------------------------------------------------------------
def _linear_kernel(x_ref, w_ref, b_ref, o_ref, *, activation):
    """One (tm, tn) output tile of  y = x @ w + b  (optionally relu)."""
    x = x_ref[...].astype(w_ref.dtype)                       # bf16 MXU inputs
    acc = jnp.dot(x, w_ref[...], preferred_element_type=jnp.float32)
    acc = acc + b_ref[...]                                   # (tm, tn) + (1, tn)
    if activation == "relu":
        acc = jnp.maximum(acc, 0.0)
    o_ref[...] = acc.astype(o_ref.dtype)


def _mha_ln_kernel(x_ref, gidr_ref, gidc_ref, wqkv_ref, bqkv_ref, wo_ref, bo_ref,
                   g_ref, beta_ref, o_ref, *, num_heads, scale, eps):
    """Fused: qkv proj -> masked multi-head attention -> out proj -> +residual -> LN.

    Rows of the (R, D) block are ordered (position, original_batch); attention is only
    allowed between rows with the same group id (same position), enforced with a
    block-diagonal mask so everything stays 2-D (no in-kernel reshapes/transposes).
    """
    x = x_ref[...]                                           # (R, D) f32
    R, D = x.shape
    dh = D // num_heads
    cdt = wqkv_ref.dtype                                     # bf16

    qkv = jnp.dot(x.astype(cdt), wqkv_ref[...],
                  preferred_element_type=jnp.float32) + bqkv_ref[...]   # (R, 3D) f32

    # block-diagonal attention mask from precomputed group ids (no int div in-kernel)
    mask = gidr_ref[...] == gidc_ref[...]                    # (R,1)==(1,R) -> (R,R)

    heads = []
    for h in range(num_heads):
        q = qkv[:, h * dh:(h + 1) * dh].astype(cdt)          # (R, dh)
        k = qkv[:, D + h * dh:D + (h + 1) * dh].astype(cdt)
        v = qkv[:, 2 * D + h * dh:2 * D + (h + 1) * dh].astype(cdt)
        # q @ k^T without an explicit transpose (contract last dims)
        s = lax.dot_general(q, k, (((1,), (1,)), ((), ())),
                            preferred_element_type=jnp.float32) * scale  # (R, R) f32
        s = jnp.where(mask, s, -1e30)
        m = jnp.max(s, axis=-1, keepdims=True)
        p = jnp.exp(s - m)
        denom = jnp.sum(p, axis=-1, keepdims=True)
        p = p * pl.reciprocal(denom, approx=True)            # EUP reciprocal
        heads.append(jnp.dot(p.astype(cdt), v,
                             preferred_element_type=jnp.float32))        # (R, dh)
    attn = jnp.concatenate(heads, axis=-1)                   # (R, D) f32

    out = jnp.dot(attn.astype(cdt), wo_ref[...],
                  preferred_element_type=jnp.float32) + bo_ref[...]      # (R, D)

    # residual + LayerNorm (biased variance, PyTorch semantics) fused as the epilogue
    z = x + out
    mean = jnp.mean(z, axis=-1, keepdims=True)
    c = z - mean
    var = jnp.mean(c * c, axis=-1, keepdims=True)
    inv = lax.rsqrt(var + eps)
    o_ref[...] = (c * inv * g_ref[...] + beta_ref[...]).astype(o_ref.dtype)


def _ffn_ln_kernel(x_ref, w1_ref, b1_ref, w2_ref, b2_ref, g_ref, beta_ref,
                   o_ref, acc_ref, *, eps):
    """Fused FFN: acc += relu(x @ w1_f + b1_f) @ w2_f over FFN chunks (grid axis 1),
    then residual + LayerNorm at the last chunk.  The (tm, tf) ReLU intermediate
    never touches HBM."""
    f = pl.program_id(1)

    @pl.when(f == 0)
    def _():
        acc_ref[...] = jnp.zeros_like(acc_ref)

    x = x_ref[...]                                           # (tm, D) f32, resident across f
    h = jnp.dot(x.astype(w1_ref.dtype), w1_ref[...],
                preferred_element_type=jnp.float32) + b1_ref[...]        # (tm, tf)
    h = jnp.maximum(h, 0.0)
    acc_ref[...] += jnp.dot(h.astype(w2_ref.dtype), w2_ref[...],
                            preferred_element_type=jnp.float32)          # (tm, D)

    @pl.when(f == pl.num_programs(1) - 1)
    def _():
        z = x + acc_ref[...] + b2_ref[...]
        mean = jnp.mean(z, axis=-1, keepdims=True)
        c = z - mean
        var = jnp.mean(c * c, axis=-1, keepdims=True)
        inv = lax.rsqrt(var + eps)
        o_ref[...] = (c * inv * g_ref[...] + beta_ref[...]).astype(o_ref.dtype)


# ----------------------------------------------------------------------------
# pallas_call wrappers
# ----------------------------------------------------------------------------
def linear(x2d, w, b, activation=None):
    """y = x2d @ w + b ; x2d (M, K) f32, w (K, N), b (N,).  Output f32 (M, N)."""
    M, K = x2d.shape
    Kw, N = w.shape
    assert K == Kw

    # Pad N up to a multiple of 128 so output stores are lane-dense (never masked).
    Np = _round_up(N, 128)
    if Np != N:
        w = jnp.pad(w, ((0, 0), (0, Np - N)))
        b = jnp.pad(b, (0, Np - N))
    w = w.astype(_MATMUL_DTYPE)                   # bf16 weight DMA (half HBM traffic)

    tm = _pick_tile(M)                            # row tiling -> pipelining + megacore
    tn = 256 if Np % 256 == 0 else 128            # 256 fills v6e/v7x MXU; also fine on v5e
    grid = (M // tm, Np // tn)

    out = pl.pallas_call(
        functools.partial(_linear_kernel, activation=activation),
        out_shape=jax.ShapeDtypeStruct((M, Np), jnp.float32),
        grid=grid,
        in_specs=[
            pl.BlockSpec((tm, K), lambda i, j: (i, 0)),
            pl.BlockSpec((K, tn), lambda i, j: (0, j)),
            pl.BlockSpec((1, tn), lambda i, j: (0, j)),
        ],
        out_specs=pl.BlockSpec((tm, tn), lambda i, j: (i, j)),
        compiler_params=pltpu.CompilerParams(
            dimension_semantics=("parallel", "parallel")),
    )(x2d, w, b.reshape(1, Np))
    return out[:, :N] if Np != N else out


def mha_ln_block(x2d, p, num_heads, group, eps=_LN_EPS):
    """Fused self-attention block.  x2d: (M, D) with rows ordered (position, batch),
    attention runs within contiguous groups of `group` rows (same position)."""
    M, D = x2d.shape
    dh = D // num_heads
    rb = _pick_row_block(M, group)
    grid = (M // rb,)

    gid = (jnp.arange(M, dtype=jnp.int32) // group)
    gid_row = gid.reshape(M, 1)
    gid_col = gid.reshape(1, M)

    wqkv = p["in_proj_w"].astype(_MATMUL_DTYPE)
    wo = p["out_w"].astype(_MATMUL_DTYPE)

    return pl.pallas_call(
        functools.partial(_mha_ln_kernel, num_heads=num_heads,
                          scale=1.0 / math.sqrt(dh), eps=eps),
        out_shape=jax.ShapeDtypeStruct((M, D), jnp.float32),
        grid=grid,
        in_specs=[
            pl.BlockSpec((rb, D), lambda i: (i, 0)),          # x
            pl.BlockSpec((rb, 1), lambda i: (i, 0)),          # group ids (rows)
            pl.BlockSpec((1, rb), lambda i: (0, i)),          # group ids (cols)
            pl.BlockSpec((D, 3 * D), lambda i: (0, 0)),       # Wqkv
            pl.BlockSpec((1, 3 * D), lambda i: (0, 0)),       # bqkv
            pl.BlockSpec((D, D), lambda i: (0, 0)),           # Wo
            pl.BlockSpec((1, D), lambda i: (0, 0)),           # bo
            pl.BlockSpec((1, D), lambda i: (0, 0)),           # ln1 gamma
            pl.BlockSpec((1, D), lambda i: (0, 0)),           # ln1 beta
        ],
        out_specs=pl.BlockSpec((rb, D), lambda i: (i, 0)),
        compiler_params=pltpu.CompilerParams(dimension_semantics=("parallel",)),
    )(x2d, gid_row, gid_col, wqkv, p["in_proj_b"].reshape(1, 3 * D),
      wo, p["out_b"].reshape(1, D), p["ln1_g"].reshape(1, D), p["ln1_b"].reshape(1, D))


def ffn_ln_block(x2d, p, eps=_LN_EPS):
    """Fused LayerNorm(x + linear2(relu(linear1(x)))).  x2d: (M, D) f32."""
    M, D = x2d.shape
    FFN = p["l1_w"].shape[1]
    tm = _pick_tile(M)
    tf = _pick_tile(FFN)                          # FFN reduction chunk kept in VMEM
    grid = (M // tm, FFN // tf)                   # reduction axis last, 'arbitrary'

    w1 = p["l1_w"].astype(_MATMUL_DTYPE)
    w2 = p["l2_w"].astype(_MATMUL_DTYPE)

    return pl.pallas_call(
        functools.partial(_ffn_ln_kernel, eps=eps),
        out_shape=jax.ShapeDtypeStruct((M, D), jnp.float32),
        grid=grid,
        in_specs=[
            pl.BlockSpec((tm, D), lambda i, f: (i, 0)),       # x (resident across f)
            pl.BlockSpec((D, tf), lambda i, f: (0, f)),       # W1 chunk
            pl.BlockSpec((1, tf), lambda i, f: (0, f)),       # b1 chunk
            pl.BlockSpec((tf, D), lambda i, f: (f, 0)),       # W2 chunk
            pl.BlockSpec((1, D), lambda i, f: (0, 0)),        # b2
            pl.BlockSpec((1, D), lambda i, f: (0, 0)),        # ln2 gamma
            pl.BlockSpec((1, D), lambda i, f: (0, 0)),        # ln2 beta
        ],
        out_specs=pl.BlockSpec((tm, D), lambda i, f: (i, 0)),
        scratch_shapes=[pltpu.VMEM((tm, D), jnp.float32)],
        compiler_params=pltpu.CompilerParams(
            dimension_semantics=("parallel", "arbitrary")),
    )(x2d, w1, p["l1_b"].reshape(1, FFN), w2, p["l2_b"].reshape(1, D),
      p["ln2_g"].reshape(1, D), p["ln2_b"].reshape(1, D))


# ----------------------------------------------------------------------------
# Transformer forward (glue in plain JAX; only 2 transposes total, as in the module)
# ----------------------------------------------------------------------------
def encoder_layer_forward(x2d, p, num_heads, group):
    x2d = mha_ln_block(x2d, p, num_heads, group)   # norm1(x + self_attn(x))
    x2d = ffn_ln_block(x2d, p)                     # norm2(x + ffn(x))
    return x2d


def transformer_predictor_forward(src, params, num_heads):
    """src: (B, S, input_dim) -> (B, S) when output_dim == 1."""
    B, S, in_dim = src.shape
    D = params["lr_w"].shape[1]

    x = linear(src.reshape(B * S, in_dim), params["lr_w"], params["lr_b"])  # (B*S, D)
    x = x.reshape(B, S, D)

    # src.permute(1, 0, 2): the batch_first encoder then attends over the ORIGINAL
    # batch axis B independently for each position s.  We keep a 2-D (S*B, D) layout
    # with rows ordered (s, b); the fused MHA kernel's block-diagonal mask groups rows
    # by s (group size = B).
    x = jnp.transpose(x, (1, 0, 2)).reshape(S * B, D)
    for lp in params["layers"]:
        x = encoder_layer_forward(x, lp, num_heads, group=B)
    x = x.reshape(S, B, D).transpose(1, 0, 2)                               # (B, S, D)

    out_dim = params["fc_w"].shape[1]
    out = linear(x.reshape(B * S, D), params["fc_w"], params["fc_b"])
    out = out.reshape(B, S, out_dim)
    if out_dim == 1:
        out = jnp.squeeze(out, axis=-1)                                     # .squeeze(-1)
    return out


# ----------------------------------------------------------------------------
# Pure-JAX f32 reference (for tolerance gating of bf16 MXU + approx reciprocal)
# ----------------------------------------------------------------------------
def _ln_ref(z, g, b, eps=_LN_EPS):
    mean = jnp.mean(z, axis=-1, keepdims=True)
    c = z - mean
    var = jnp.mean(c * c, axis=-1, keepdims=True)
    return c * lax.rsqrt(var + eps) * g + b


def reference_forward(src, params, num_heads):
    B, S, _ = src.shape
    D = params["lr_w"].shape[1]
    H = num_heads
    dh = D // H
    x = src @ params["lr_w"] + params["lr_b"]
    x = jnp.transpose(x, (1, 0, 2))                # (S, B, D)
    for p in params["layers"]:
        qkv = x @ p["in_proj_w"] + p["in_proj_b"]
        q, k, v = jnp.split(qkv, 3, axis=-1)
        def heads(t):
            return t.reshape(S, B, H, dh).transpose(0, 2, 1, 3)
        qh, kh, vh = heads(q), heads(k), heads(v)
        s = jnp.einsum("shqd,shkd->shqk", qh, kh) / math.sqrt(dh)
        pa = jax.nn.softmax(s, axis=-1)
        o = jnp.einsum("shqk,shkd->shqd", pa, vh)
        o = o.transpose(0, 2, 1, 3).reshape(S, B, D)
        o = o @ p["out_w"] + p["out_b"]
        x = _ln_ref(x + o, p["ln1_g"], p["ln1_b"])
        h = jax.nn.relu(x @ p["l1_w"] + p["l1_b"])
        h = h @ p["l2_w"] + p["l2_b"]
        x = _ln_ref(x + h, p["ln2_g"], p["ln2_b"])
    x = jnp.transpose(x, (1, 0, 2))
    out = x @ params["fc_w"] + params["fc_b"]
    return jnp.squeeze(out, axis=-1)


# ----------------------------------------------------------------------------
# Deterministic parameter init (synthetic, not a checkpoint load)
# ----------------------------------------------------------------------------
def init_params(key, input_dim, model_dim, num_layers, output_dim, ffn_dim):
    def nrm(k, shape, scale=0.05):
        return (scale * jax.random.normal(k, shape)).astype(jnp.float32)

    keys = jax.random.split(key, 4 + num_layers)
    params = {
        "lr_w": nrm(keys[0], (input_dim, model_dim)),
        "lr_b": nrm(keys[1], (model_dim,)),
        "fc_w": nrm(keys[2], (model_dim, output_dim)),
        "fc_b": nrm(keys[3], (output_dim,)),
        "layers": [],
    }
    for li in range(num_layers):
        ks = jax.random.split(keys[4 + li], 8)
        params["layers"].append({
            "in_proj_w": nrm(ks[0], (model_dim, 3 * model_dim)),
            "in_proj_b": nrm(ks[1], (3 * model_dim,)),
            "out_w": nrm(ks[2], (model_dim, model_dim)),
            "out_b": nrm(ks[3], (model_dim,)),
            "l1_w": nrm(ks[4], (model_dim, ffn_dim)),
            "l1_b": nrm(ks[5], (ffn_dim,)),
            "l2_w": nrm(ks[6], (ffn_dim, model_dim)),
            "l2_b": nrm(ks[7], (model_dim,)),
            "ln1_g": jnp.ones((model_dim,), jnp.float32),
            "ln1_b": jnp.zeros((model_dim,), jnp.float32),
            "ln2_g": jnp.ones((model_dim,), jnp.float32),
            "ln2_b": jnp.zeros((model_dim,), jnp.float32),
        })
    return params


if __name__ == "__main__":
    # Small shapes consistent with the module's forward.
    BATCH, SEQ = 2, 8
    INPUT_DIM, MODEL_DIM, NUM_HEADS, NUM_LAYERS, OUTPUT_DIM = 16, 32, 4, 2, 1
    FFN_DIM = 2048   # nn.TransformerEncoderLayer default dim_feedforward

    key = jax.random.PRNGKey(0)
    k_x, k_p = jax.random.split(key)
    src = jax.random.normal(k_x, (BATCH, SEQ, INPUT_DIM), dtype=jnp.float32)
    params = init_params(k_p, INPUT_DIM, MODEL_DIM, NUM_LAYERS, OUTPUT_DIM, FFN_DIM)

    fwd = jax.jit(functools.partial(transformer_predictor_forward, num_heads=NUM_HEADS))
    out = fwd(src, params)
    jax.block_until_ready(out)

    assert out.shape == (BATCH, SEQ), out.shape
    assert bool(jnp.all(jnp.isfinite(out)))

    # Tolerance gate vs. f32 reference (bf16 MXU inputs + approx reciprocal).
    ref = reference_forward(src, params, NUM_HEADS)
    err = float(jnp.max(jnp.abs(out - ref)))
    assert err < 5e-2, f"max abs diff vs f32 reference too large: {err}"

    print("KERNEL_OK")
</pallas_src>

<mosaic_0001>
module attributes {stable_mosaic.version = 11 : i64} {
  func.func @_linear_kernel(%arg0: i32, %arg1: i32, %arg2: memref<16x16xf32, #tpu.memory_space<vmem>>, %arg3: memref<16x128xbf16, #tpu.memory_space<vmem>>, %arg4: memref<1x128xf32, #tpu.memory_space<vmem>>, %arg5: memref<16x128xf32, #tpu.memory_space<vmem>>) attributes {dimension_semantics = [#tpu.dimension_semantics<parallel>, #tpu.dimension_semantics<parallel>], iteration_bounds = array<i64: 1, 1>, scalar_prefetch = 0 : i64, scratch_operands = 0 : i64, tpu.core_type = #tpu.core_type<tc>, window_params = [{transform_indices = @transform_0, window_bounds = array<i64: 16, 16>}, {transform_indices = @transform_1, window_bounds = array<i64: 16, 128>}, {transform_indices = @transform_2, window_bounds = array<i64: 1, 128>}, {transform_indices = @transform_3, window_bounds = array<i64: 16, 128>}]} {
    %c0 = arith.constant 0 : index
    %c0_0 = arith.constant 0 : index
    %0 = vector.load %arg2[%c0, %c0_0] : memref<16x16xf32, #tpu.memory_space<vmem>>, vector<16x16xf32>
    %1 = arith.truncf %0 : vector<16x16xf32> to vector<16x16xbf16>
    %c0_1 = arith.constant 0 : index
    %c0_2 = arith.constant 0 : index
    %2 = vector.load %arg3[%c0_1, %c0_2] : memref<16x128xbf16, #tpu.memory_space<vmem>>, vector<16x128xbf16>
    %cst = arith.constant dense<0.000000e+00> : vector<16x128xf32>
    %3 = tpu.matmul %1, %2, %cst {dimension_numbers = #tpu.dot_dimension_numbers<[1], [0], [0], [1], [0, 0, 1, 1], [], []>} : vector<16x16xbf16>, vector<16x128xbf16>, vector<16x128xf32> -> vector<16x128xf32>
    %c0_3 = arith.constant 0 : index
    %c0_4 = arith.constant 0 : index
    %4 = vector.load %arg4[%c0_3, %c0_4] : memref<1x128xf32, #tpu.memory_space<vmem>>, vector<1x128xf32>
    %5 = vector.broadcast %4 : vector<1x128xf32> to vector<16x128xf32>
    %6 = arith.addf %3, %5 : vector<16x128xf32>
    %c0_5 = arith.constant 0 : index
    %c0_6 = arith.constant 0 : index
    %7 = vector.load %arg5[%c0_5, %c0_6] : memref<16x128xf32, #tpu.memory_space<vmem>>, vector<16x128xf32>
    tpu.vector_store %arg5[%c0_5, %c0_6], %6 {strides = array<i32>} : memref<16x128xf32, #tpu.memory_space<vmem>>, vector<16x128xf32>,
    return
  }
  func.func @transform_0(%arg0: i32, %arg1: i32) -> (i32, i32) {
    %c0_i32 = arith.constant 0 : i32
    %c0_i32_0 = arith.constant 0 : i32
    return %arg0, %c0_i32 : i32, i32
  }
  func.func @transform_1(%arg0: i32, %arg1: i32) -> (i32, i32) {
    %c0_i32 = arith.constant 0 : i32
    %c0_i32_0 = arith.constant 0 : i32
    return %c0_i32, %arg1 : i32, i32
  }
  func.func @transform_2(%arg0: i32, %arg1: i32) -> (i32, i32) {
    %c0_i32 = arith.constant 0 : i32
    %c0_i32_0 = arith.constant 0 : i32
    return %c0_i32, %arg1 : i32, i32
  }
  func.func @transform_3(%arg0: i32, %arg1: i32) -> (i32, i32) {
    %c0_i32 = arith.constant 0 : i32
    return %arg0, %arg1 : i32, i32
  }
}

module attributes {stable_mosaic.version = 11 : i64} {
  func.func @_mha_ln_kernel(%arg0: i32, %arg1: memref<16x32xf32, #tpu.memory_space<vmem>>, %arg2: memref<16x1xi32, #tpu.memory_space<vmem>>, %arg3: memref<1x16xi32, #tpu.memory_space<vmem>>, %arg4: memref<32x96xbf16, #tpu.memory_space<vmem>>, %arg5: memref<1x96xf32, #tpu.memory_space<vmem>>, %arg6: memref<32x32xbf16, #tpu.memory_space<vmem>>, %arg7: memref<1x32xf32, #tpu.memory_space<vmem>>, %arg8: memref<1x32xf32, #tpu.memory_space<vmem>>, %arg9: memref<1x32xf32, #tpu.memory_space<vmem>>, %arg10: memref<16x32xf32, #tpu.memory_space<vmem>>) attributes {dimension_semantics = [#tpu.dimension_semantics<parallel>], iteration_bounds = array<i64: 1>, scalar_prefetch = 0 : i64, scratch_operands = 0 : i64, tpu.core_type = #tpu.core_type<tc>, window_params = [{transform_indices = @transform_0, window_bounds = array<i64: 16, 32>}, {transform_indices = @transform_1, window_bounds = array<i64: 16, 1>}, {transform_indices = @transform_2, window_bounds = array<i64: 1, 16>}, {pipeline_mode = #tpu.pipeline_mode<synchronous>, transform_indices = @transform_3, window_bounds = array<i64: 32, 96>}, {pipeline_mode = #tpu.pipeline_mode<synchronous>, transform_indices = @transform_4, window_bounds = array<i64: 1, 96>}, {pipeline_mode = #tpu.pipeline_mode<synchronous>, transform_indices = @transform_5, window_bounds = array<i64: 32, 32>}, {pipeline_mode = #tpu.pipeline_mode<synchronous>, transform_indices = @transform_6, window_bounds = array<i64: 1, 32>}, {pipeline_mode = #tpu.pipeline_mode<synchronous>, transform_indices = @transform_7, window_bounds = array<i64: 1, 32>}, {pipeline_mode = #tpu.pipeline_mode<synchronous>, transform_indices = @transform_8, window_bounds = array<i64: 1, 32>}, {transform_indices = @transform_9, window_bounds = array<i64: 16, 32>}]} {
    %c0 = arith.constant 0 : index
    %c0_0 = arith.constant 0 : index
    %0 = vector.load %arg1[%c0, %c0_0] : memref<16x32xf32, #tpu.memory_space<vmem>>, vector<16x32xf32>
    %1 = arith.truncf %0 : vector<16x32xf32> to vector<16x32xbf16>
    %c0_1 = arith.constant 0 : index
    %c0_2 = arith.constant 0 : index
    %2 = vector.load %arg4[%c0_1, %c0_2] : memref<32x96xbf16, #tpu.memory_space<vmem>>, vector<32x96xbf16>
    %cst = arith.constant dense<0.000000e+00> : vector<16x96xf32>
    %3 = tpu.matmul %1, %2, %cst {dimension_numbers = #tpu.dot_dimension_numbers<[1], [0], [0], [1], [0, 0, 1, 1], [], []>} : vector<16x32xbf16>, vector<32x96xbf16>, vector<16x96xf32> -> vector<16x96xf32>
    %c0_3 = arith.constant 0 : index
    %c0_4 = arith.constant 0 : index
    %4 = vector.load %arg5[%c0_3, %c0_4] : memref<1x96xf32, #tpu.memory_space<vmem>>, vector<1x96xf32>
    %5 = vector.broadcast %4 : vector<1x96xf32> to vector<16x96xf32>
    %6 = arith.addf %3, %5 : vector<16x96xf32>
    %c0_5 = arith.constant 0 : index
    %c0_6 = arith.constant 0 : index
    %7 = vector.load %arg2[%c0_5, %c0_6] : memref<16x1xi32, #tpu.memory_space<vmem>>, vector<16x1xi32>
    %c0_7 = arith.constant 0 : index
    %c0_8 = arith.constant 0 : index
    %8 = vector.load %arg3[%c0_7, %c0_8] : memref<1x16xi32, #tpu.memory_space<vmem>>, vector<1x16xi32>
    %9 = vector.broadcast %7 : vector<16x1xi32> to vector<16x16xi32>
    %10 = vector.broadcast %8 : vector<1x16xi32> to vector<16x16xi32>
    %11 = arith.cmpi eq, %9, %10 : vector<16x16xi32>
    %12 = vector.extract_strided_slice %6 {offsets = [0, 0], sizes = [16, 8], strides = [1, 1]} : vector<16x96xf32> to vector<16x8xf32>
    %13 = arith.truncf %12 : vector<16x8xf32> to vector<16x8xbf16>
    %14 = vector.extract_strided_slice %6 {offsets = [0, 32], sizes = [16, 8], strides = [1, 1]} : vector<16x96xf32> to vector<16x8xf32>
    %15 = arith.truncf %14 : vector<16x8xf32> to vector<16x8xbf16>
    %16 = vector.extract_strided_slice %6 {offsets = [0, 64], sizes = [16, 8], strides = [1, 1]} : vector<16x96xf32> to vector<16x8xf32>
    %17 = arith.truncf %16 : vector<16x8xf32> to vector<16x8xbf16>
    %cst_9 = arith.constant dense<0.000000e+00> : vector<16x16xf32>
    %18 = tpu.matmul %13, %15, %cst_9 {dimension_numbers = #tpu.dot_dimension_numbers<[1], [1], [0], [0], [0, 0, 1, 0], [], []>} : vector<16x8xbf16>, vector<16x8xbf16>, vector<16x16xf32> -> vector<16x16xf32>
    %cst_10 = arith.constant 0.353553385 : f32
    %19 = vector.broadcast %cst_10 : f32 to vector<16x16xf32>
    %20 = arith.mulf %18, %19 : vector<16x16xf32>
    %cst_11 = arith.constant -1.000000e+30 : f32
    %21 = vector.broadcast %cst_11 : f32 to vector<16x16xf32>
    %22 = arith.select %11, %20, %21 : vector<16x16xi1>, vector<16x16xf32>
    %cst_12 = arith.constant dense<0xFF800000> : vector<16xf32>
    %23 = vector.multi_reduction <maximumf>, %22, %cst_12 [1] : vector<16x16xf32> to vector<16xf32>
    %24 = vector.shape_cast %23 : vector<16xf32> to vector<16x1xf32>
    %25 = vector.broadcast %24 : vector<16x1xf32> to vector<16x16xf32>
    %26 = arith.subf %22, %25 : vector<16x16xf32>
    %27 = math.exp %26 : vector<16x16xf32>
    %cst_13 = arith.constant dense<0.000000e+00> : vector<16xf32>
    %28 = vector.multi_reduction <add>, %27, %cst_13 [1] : vector<16x16xf32> to vector<16xf32>
    %29 = vector.shape_cast %28 : vector<16xf32> to vector<16x1xf32>
    %30 = tpu.reciprocal %29 {approx = true} : vector<16x1xf32> -> vector<16x1xf32>
    %31 = vector.broadcast %30 : vector<16x1xf32> to vector<16x16xf32>
    %32 = arith.mulf %27, %31 : vector<16x16xf32>
    %33 = arith.truncf %32 : vector<16x16xf32> to vector<16x16xbf16>
    %cst_14 = arith.constant dense<0.000000e+00> : vector<16x8xf32>
    %34 = tpu.matmul %33, %17, %cst_14 {dimension_numbers = #tpu.dot_dimension_numbers<[1], [0], [0], [1], [0, 0, 1, 1], [], []>} : vector<16x16xbf16>, vector<16x8xbf16>, vector<16x8xf32> -> vector<16x8xf32>
    %35 = vector.extract_strided_slice %6 {offsets = [0, 8], sizes = [16, 8], strides = [1, 1]} : vector<16x96xf32> to vector<16x8xf32>
    %36 = arith.truncf %35 : vector<16x8xf32> to vector<16x8xbf16>
    %37 = vector.extract_strided_slice %6 {offsets = [0, 40], sizes = [16, 8], strides = [1, 1]} : vector<16x96xf32> to vector<16x8xf32>
    %38 = arith.truncf %37 : vector<16x8xf32> to vector<16x8xbf16>
    %39 = vector.extract_strided_slice %6 {offsets = [0, 72], sizes = [16, 8], strides = [1, 1]} : vector<16x96xf32> to vector<16x8xf32>
    %40 = arith.truncf %39 : vector<16x8xf32> to vector<16x8xbf16>
    %cst_15 = arith.constant dense<0.000000e+00> : vector<16x16xf32>
    %41 = tpu.matmul %36, %38, %cst_15 {dimension_numbers = #tpu.dot_dimension_numbers<[1], [1], [0], [0], [0, 0, 1, 0], [], []>} : vector<16x8xbf16>, vector<16x8xbf16>, vector<16x16xf32> -> vector<16x16xf32>
    %cst_16 = arith.constant 0.353553385 : f32
    %42 = vector.broadcast %cst_16 : f32 to vector<16x16xf32>
    %43 = arith.mulf %41, %42 : vector<16x16xf32>
    %cst_17 = arith.constant -1.000000e+30 : f32
    %44 = vector.broadcast %cst_17 : f32 to vector<16x16xf32>
    %45 = arith.select %11, %43, %44 : vector<16x16xi1>, vector<16x16xf32>
    %cst_18 = arith.constant dense<0xFF800000> : vector<16xf32>
    %46 = vector.multi_reduction <maximumf>, %45, %cst_18 [1] : vector<16x16xf32> to vector<16xf32>
    %47 = vector.shape_cast %46 : vector<16xf32> to vector<16x1xf32>
    %48 = vector.broadcast %47 : vector<16x1xf32> to vector<16x16xf32>
    %49 = arith.subf %45, %48 : vector<16x16xf32>
    %50 = math.exp %49 : vector<16x16xf32>
    %cst_19 = arith.constant dense<0.000000e+00> : vector<16xf32>
    %51 = vector.multi_reduction <add>, %50, %cst_19 [1] : vector<16x16xf32> to vector<16xf32>
    %52 = vector.shape_cast %51 : vector<16xf32> to vector<16x1xf32>
    %53 = tpu.reciprocal %52 {approx = true} : vector<16x1xf32> -> vector<16x1xf32>
    %54 = vector.broadcast %53 : vector<16x1xf32> to vector<16x16xf32>
    %55 = arith.mulf %50, %54 : vector<16x16xf32>
    %56 = arith.truncf %55 : vector<16x16xf32> to vector<16x16xbf16>
    %cst_20 = arith.constant dense<0.000000e+00> : vector<16x8xf32>
    %57 = tpu.matmul %56, %40, %cst_20 {dimension_numbers = #tpu.dot_dimension_numbers<[1], [0], [0], [1], [0, 0, 1, 1], [], []>} : vector<16x16xbf16>, vector<16x8xbf16>, vector<16x8xf32> -> vector<16x8xf32>
    %58 = vector.extract_strided_slice %6 {offsets = [0, 16], sizes = [16, 8], strides = [1, 1]} : vector<16x96xf32> to vector<16x8xf32>
    %59 = arith.truncf %58 : vector<16x8xf32> to vector<16x8xbf16>
    %60 = vector.extract_strided_slice %6 {offsets = [0, 48], sizes = [16, 8], strides = [1, 1]} : vector<16x96xf32> to vector<16x8xf32>
    %61 = arith.truncf %60 : vector<16x8xf32> to vector<16x8xbf16>
    %62 = vector.extract_strided_slice %6 {offsets = [0, 80], sizes = [16, 8], strides = [1, 1]} : vector<16x96xf32> to vector<16x8xf32>
    %63 = arith.truncf %62 : vector<16x8xf32> to vector<16x8xbf16>
    %cst_21 = arith.constant dense<0.000000e+00> : vector<16x16xf32>
    %64 = tpu.matmul %59, %61, %cst_21 {dimension_numbers = #tpu.dot_dimension_numbers<[1], [1], [0], [0], [0, 0, 1, 0], [], []>} : vector<16x8xbf16>, vector<16x8xbf16>, vector<16x16xf32> -> vector<16x16xf32>
    %cst_22 = arith.constant 0.353553385 : f32
    %65 = vector.broadcast %cst_22 : f32 to vector<16x16xf32>
    %66 = arith.mulf %64, %65 : vector<16x16xf32>
    %cst_23 = arith.constant -1.000000e+30 : f32
    %67 = vector.broadcast %cst_23 : f32 to vector<16x16xf32>
    %68 = arith.select %11, %66, %67 : vector<16x16xi1>, vector<16x16xf32>
    %cst_24 = arith.constant dense<0xFF800000> : vector<16xf32>
    %69 = vector.multi_reduction <maximumf>, %68, %cst_24 [1] : vector<16x16xf32> to vector<16xf32>
    %70 = vector.shape_cast %69 : vector<16xf32> to vector<16x1xf32>
    %71 = vector.broadcast %70 : vector<16x1xf32> to vector<16x16xf32>
    %72 = arith.subf %68, %71 : vector<16x16xf32>
    %73 = math.exp %72 : vector<16x16xf32>
    %cst_25 = arith.constant dense<0.000000e+00> : vector<16xf32>
    %74 = vector.multi_reduction <add>, %73, %cst_25 [1] : vector<16x16xf32> to vector<16xf32>
    %75 = vector.shape_cast %74 : vector<16xf32> to vector<16x1xf32>
    %76 = tpu.reciprocal %75 {approx = true} : vector<16x1xf32> -> vector<16x1xf32>
    %77 = vector.broadcast %76 : vector<16x1xf32> to vector<16x16xf32>
    %78 = arith.mulf %73, %77 : vector<16x16xf32>
    %79 = arith.truncf %78 : vector<16x16xf32> to vector<16x16xbf16>
    %cst_26 = arith.constant dense<0.000000e+00> : vector<16x8xf32>
    %80 = tpu.matmul %79, %63, %cst_26 {dimension_numbers = #tpu.dot_dimension_numbers<[1], [0], [0], [1], [0, 0, 1, 1], [], []>} : vector<16x16xbf16>, vector<16x8xbf16>, vector<16x8xf32> -> vector<16x8xf32>
    %81 = vector.extract_strided_slice %6 {offsets = [0, 24], sizes = [16, 8], strides = [1, 1]} : vector<16x96xf32> to vector<16x8xf32>
    %82 = arith.truncf %81 : vector<16x8xf32> to vector<16x8xbf16>
    %83 = vector.extract_strided_slice %6 {offsets = [0, 56], sizes = [16, 8], strides = [1, 1]} : vector<16x96xf32> to vector<16x8xf32>
    %84 = arith.truncf %83 : vector<16x8xf32> to vector<16x8xbf16>
    %85 = vector.extract_strided_slice %6 {offsets = [0, 88], sizes = [16, 8], strides = [1, 1]} : vector<16x96xf32> to vector<16x8xf32>
    %86 = arith.truncf %85 : vector<16x8xf32> to vector<16x8xbf16>
    %cst_27 = arith.constant dense<0.000000e+00> : vector<16x16xf32>
    %87 = tpu.matmul %82, %84, %cst_27 {dimension_numbers = #tpu.dot_dimension_numbers<[1], [1], [0], [0], [0, 0, 1, 0], [], []>} : vector<16x8xbf16>, vector<16x8xbf16>, vector<16x16xf32> -> vector<16x16xf32>
    %cst_28 = arith.constant 0.353553385 : f32
    %88 = vector.broadcast %cst_28 : f32 to vector<16x16xf32>
    %89 = arith.mulf %87, %88 : vector<16x16xf32>
    %cst_29 = arith.constant -1.000000e+30 : f32
    %90 = vector.broadcast %cst_29 : f32 to vector<16x16xf32>
    %91 = arith.select %11, %89, %90 : vector<16x16xi1>, vector<16x16xf32>
    %cst_30 = arith.constant dense<0xFF800000> : vector<16xf32>
    %92 = vector.multi_reduction <maximumf>, %91, %cst_30 [1] : vector<16x16xf32> to vector<16xf32>
    %93 = vector.shape_cast %92 : vector<16xf32> to vector<16x1xf32>
    %94 = vector.broadcast %93 : vector<16x1xf32> to vector<16x16xf32>
    %95 = arith.subf %91, %94 : vector<16x16xf32>
    %96 = math.exp %95 : vector<16x16xf32>
    %cst_31 = arith.constant dense<0.000000e+00> : vector<16xf32>
    %97 = vector.multi_reduction <add>, %96, %cst_31 [1] : vector<16x16xf32> to vector<16xf32>
    %98 = vector.shape_cast %97 : vector<16xf32> to vector<16x1xf32>
    %99 = tpu.reciprocal %98 {approx = true} : vector<16x1xf32> -> vector<16x1xf32>
    %100 = vector.broadcast %99 : vector<16x1xf32> to vector<16x16xf32>
    %101 = arith.mulf %96, %100 : vector<16x16xf32>
    %102 = arith.truncf %101 : vector<16x16xf32> to vector<16x16xbf16>
    %cst_32 = arith.constant dense<0.000000e+00> : vector<16x8xf32>
    %103 = tpu.matmul %102, %86, %cst_32 {dimension_numbers = #tpu.dot_dimension_numbers<[1], [0], [0], [1], [0, 0, 1, 1], [], []>} : vector<16x16xbf16>, vector<16x8xbf16>, vector<16x8xf32> -> vector<16x8xf32>
    %104 = tpu.concatenate %34, %57, %80, %103 in 1 : vector<16x8xf32>, vector<16x8xf32>, vector<16x8xf32>, vector<16x8xf32> -> vector<16x32xf32>
    %105 = arith.truncf %104 : vector<16x32xf32> to vector<16x32xbf16>
    %c0_33 = arith.constant 0 : index
    %c0_34 = arith.constant 0 : index
    %106 = vector.load %arg6[%c0_33, %c0_34] : memref<32x32xbf16, #tpu.memory_space<vmem>>, vector<32x32xbf16>
    %cst_35 = arith.constant dense<0.000000e+00> : vector<16x32xf32>
    %107 = tpu.matmul %105, %106, %cst_35 {dimension_numbers = #tpu.dot_dimension_numbers<[1], [0], [0], [1], [0, 0, 1, 1], [], []>} : vector<16x32xbf16>, vector<32x32xbf16>, vector<16x32xf32> -> vector<16x32xf32>
    %c0_36 = arith.constant 0 : index
    %c0_37 = arith.constant 0 : index
    %108 = vector.load %arg7[%c0_36, %c0_37] : memref<1x32xf32, #tpu.memory_space<vmem>>, vector<1x32xf32>
    %109 = vector.broadcast %108 : vector<1x32xf32> to vector<16x32xf32>
    %110 = arith.addf %107, %109 : vector<16x32xf32>
    %111 = arith.addf %0, %110 : vector<16x32xf32>
    %cst_38 = arith.constant dense<0.000000e+00> : vector<16xf32>
    %112 = vector.multi_reduction <add>, %111, %cst_38 [1] : vector<16x32xf32> to vector<16xf32>
    %113 = vector.shape_cast %112 : vector<16xf32> to vector<16x1xf32>
    %cst_39 = arith.constant 3.200000e+01 : f32
    %114 = vector.broadcast %cst_39 : f32 to vector<16x1xf32>
    %115 = arith.divf %113, %114 : vector<16x1xf32>
    %116 = vector.broadcast %115 : vector<16x1xf32> to vector<16x32xf32>
    %117 = arith.subf %111, %116 : vector<16x32xf32>
    %118 = arith.mulf %117, %117 : vector<16x32xf32>
    %cst_40 = arith.constant dense<0.000000e+00> : vector<16xf32>
    %119 = vector.multi_reduction <add>, %118, %cst_40 [1] : vector<16x32xf32> to vector<16xf32>
    %120 = vector.shape_cast %119 : vector<16xf32> to vector<16x1xf32>
    %cst_41 = arith.constant 3.200000e+01 : f32
    %121 = vector.broadcast %cst_41 : f32 to vector<16x1xf32>
    %122 = arith.divf %120, %121 : vector<16x1xf32>
    %cst_42 = arith.constant 9.99999974E-6 : f32
    %123 = vector.broadcast %cst_42 : f32 to vector<16x1xf32>
    %124 = arith.addf %122, %123 : vector<16x1xf32>
    %125 = math.rsqrt %124 : vector<16x1xf32>
    %126 = vector.broadcast %125 : vector<16x1xf32> to vector<16x32xf32>
    %127 = arith.mulf %117, %126 : vector<16x32xf32>
    %c0_43 = arith.constant 0 : index
    %c0_44 = arith.constant 0 : index
    %128 = vector.load %arg8[%c0_43, %c0_44] : memref<1x32xf32, #tpu.memory_space<vmem>>, vector<1x32xf32>
    %129 = vector.broadcast %128 : vector<1x32xf32> to vector<16x32xf32>
    %130 = arith.mulf %127, %129 : vector<16x32xf32>
    %c0_45 = arith.constant 0 : index
    %c0_46 = arith.constant 0 : index
    %131 = vector.load %arg9[%c0_45, %c0_46] : memref<1x32xf32, #tpu.memory_space<vmem>>, vector<1x32xf32>
    %132 = vector.broadcast %131 : vector<1x32xf32> to vector<16x32xf32>
    %133 = arith.addf %130, %132 : vector<16x32xf32>
    %c0_47 = arith.constant 0 : index
    %c0_48 = arith.constant 0 : index
    %134 = vector.load %arg10[%c0_47, %c0_48] : memref<16x32xf32, #tpu.memory_space<vmem>>, vector<16x32xf32>
    tpu.vector_store %arg10[%c0_47, %c0_48], %133 {strides = array<i32>} : memref<16x32xf32, #tpu.memory_space<vmem>>, vector<16x32xf32>,
    return
  }
  func.func @transform_0(%arg0: i32) -> (i32, i32) {
    %c0_i32 = arith.constant 0 : i32
    %c0_i32_0 = arith.constant 0 : i32
    return %arg0, %c0_i32 : i32, i32
  }
  func.func @transform_1(%arg0: i32) -> (i32, i32) {
    %c0_i32 = arith.constant 0 : i32
    %c0_i32_0 = arith.constant 0 : i32
    return %arg0, %c0_i32 : i32, i32
  }
  func.func @transform_2(%arg0: i32) -> (i32, i32) {
    %c0_i32 = arith.constant 0 : i32
    %c0_i32_0 = arith.constant 0 : i32
    return %c0_i32, %arg0 : i32, i32
  }
  func.func @transform_3(%arg0: i32) -> (i32, i32) {
    %c0_i32 = arith.constant 0 : i32
    %c0_i32_0 = arith.constant 0 : i32
    %c0_i32_1 = arith.constant 0 : i32
    return %c0_i32, %c0_i32_0 : i32, i32
  }
  func.func @transform_4(%arg0: i32) -> (i32, i32) {
    %c0_i32 = arith.constant 0 : i32
    %c0_i32_0 = arith.constant 0 : i32
    %c0_i32_1 = arith.constant 0 : i32
    return %c0_i32, %c0_i32_0 : i32, i32
  }
  func.func @transform_5(%arg0: i32) -> (i32, i32) {
    %c0_i32 = arith.constant 0 : i32
    %c0_i32_0 = arith.constant 0 : i32
    %c0_i32_1 = arith.constant 0 : i32
    return %c0_i32, %c0_i32_0 : i32, i32
  }
  func.func @transform_6(%arg0: i32) -> (i32, i32) {
    %c0_i32 = arith.constant 0 : i32
    %c0_i32_0 = arith.constant 0 : i32
    %c0_i32_1 = arith.constant 0 : i32
    return %c0_i32, %c0_i32_0 : i32, i32
  }
  func.func @transform_7(%arg0: i32) -> (i32, i32) {
    %c0_i32 = arith.constant 0 : i32
    %c0_i32_0 = arith.constant 0 : i32
    %c0_i32_1 = arith.constant 0 : i32
    return %c0_i32, %c0_i32_0 : i32, i32
  }
  func.func @transform_8(%arg0: i32) -> (i32, i32) {
    %c0_i32 = arith.constant 0 : i32
    %c0_i32_0 = arith.constant 0 : i32
    %c0_i32_1 = arith.constant 0 : i32
    return %c0_i32, %c0_i32_0 : i32, i32
  }
  func.func @transform_9(%arg0: i32) -> (i32, i32) {
    %c0_i32 = arith.constant 0 : i32
    %c0_i32_0 = arith.constant 0 : i32
    return %arg0, %c0_i32 : i32, i32
  }
}

module attributes {stable_mosaic.version = 11 : i64} {
  func.func @_ffn_ln_kernel(%arg0: i32, %arg1: i32, %arg2: memref<16x32xf32, #tpu.memory_space<vmem>>, %arg3: memref<32x512xbf16, #tpu.memory_space<vmem>>, %arg4: memref<1x512xf32, #tpu.memory_space<vmem>>, %arg5: memref<512x32xbf16, #tpu.memory_space<vmem>>, %arg6: memref<1x32xf32, #tpu.memory_space<vmem>>, %arg7: memref<1x32xf32, #tpu.memory_space<vmem>>, %arg8: memref<1x32xf32, #tpu.memory_space<vmem>>, %arg9: memref<16x32xf32, #tpu.memory_space<vmem>>, %arg10: memref<16x32xf32, #tpu.memory_space<vmem>>) attributes {dimension_semantics = [#tpu.dimension_semantics<parallel>, #tpu.dimension_semantics<arbitrary>], iteration_bounds = array<i64: 1, 4>, scalar_prefetch = 0 : i64, scratch_operands = 1 : i64, tpu.core_type = #tpu.core_type<tc>, window_params = [{transform_indices = @transform_0, window_bounds = array<i64: 16, 32>}, {transform_indices = @transform_1, window_bounds = array<i64: 32, 512>}, {transform_indices = @transform_2, window_bounds = array<i64: 1, 512>}, {transform_indices = @transform_3, window_bounds = array<i64: 512, 32>}, {pipeline_mode = #tpu.pipeline_mode<synchronous>, transform_indices = @transform_4, window_bounds = array<i64: 1, 32>}, {pipeline_mode = #tpu.pipeline_mode<synchronous>, transform_indices = @transform_5, window_bounds = array<i64: 1, 32>}, {pipeline_mode = #tpu.pipeline_mode<synchronous>, transform_indices = @transform_6, window_bounds = array<i64: 1, 32>}, {transform_indices = @transform_7, window_bounds = array<i64: 16, 32>}]} {
    %c0_i32 = arith.constant 0 : i32
    %0 = arith.cmpi eq, %arg1, %c0_i32 : i32
    %1 = arith.extui %0 : i1 to i32
    %c0_i32_0 = arith.constant 0 : i32
    %2 = arith.cmpi ne, %1, %c0_i32_0 : i32
    scf.if %2 {
      %cst_15 = arith.constant 0.000000e+00 : f32
      %21 = vector.broadcast %cst_15 : f32 to vector<16x32xf32>
      %c0_16 = arith.constant 0 : index
      %c0_17 = arith.constant 0 : index
      %22 = vector.load %arg10[%c0_16, %c0_17] : memref<16x32xf32, #tpu.memory_space<vmem>>, vector<16x32xf32>
      tpu.vector_store %arg10[%c0_16, %c0_17], %21 {strides = array<i32>} : memref<16x32xf32, #tpu.memory_space<vmem>>, vector<16x32xf32>,
    } else {
    }
    %c0 = arith.constant 0 : index
    %c0_1 = arith.constant 0 : index
    %3 = vector.load %arg2[%c0, %c0_1] : memref<16x32xf32, #tpu.memory_space<vmem>>, vector<16x32xf32>
    %4 = arith.truncf %3 : vector<16x32xf32> to vector<16x32xbf16>
    %c0_2 = arith.constant 0 : index
    %c0_3 = arith.constant 0 : index
    %5 = vector.load %arg3[%c0_2, %c0_3] : memref<32x512xbf16, #tpu.memory_space<vmem>>, vector<32x512xbf16>
    %cst = arith.constant dense<0.000000e+00> : vector<16x512xf32>
    %6 = tpu.matmul %4, %5, %cst {dimension_numbers = #tpu.dot_dimension_numbers<[1], [0], [0], [1], [0, 0, 1, 1], [], []>} : vector<16x32xbf16>, vector<32x512xbf16>, vector<16x512xf32> -> vector<16x512xf32>
    %c0_4 = arith.constant 0 : index
    %c0_5 = arith.constant 0 : index
    %7 = vector.load %arg4[%c0_4, %c0_5] : memref<1x512xf32, #tpu.memory_space<vmem>>, vector<1x512xf32>
    %8 = vector.broadcast %7 : vector<1x512xf32> to vector<16x512xf32>
    %9 = arith.addf %6, %8 : vector<16x512xf32>
    %cst_6 = arith.constant 0.000000e+00 : f32
    %10 = vector.broadcast %cst_6 : f32 to vector<16x512xf32>
    %11 = arith.maximumf %9, %10 : vector<16x512xf32>
    %c0_7 = arith.constant 0 : index
    %c0_8 = arith.constant 0 : index
    %12 = vector.load %arg10[%c0_7, %c0_8] : memref<16x32xf32, #tpu.memory_space<vmem>>, vector<16x32xf32>
    %13 = arith.truncf %11 : vector<16x512xf32> to vector<16x512xbf16>
    %c0_9 = arith.constant 0 : index
    %c0_10 = arith.constant 0 : index
    %14 = vector.load %arg5[%c0_9, %c0_10] : memref<512x32xbf16, #tpu.memory_space<vmem>>, vector<512x32xbf16>
    %cst_11 = arith.constant dense<0.000000e+00> : vector<16x32xf32>
    %15 = tpu.matmul %13, %14, %cst_11 {dimension_numbers = #tpu.dot_dimension_numbers<[1], [0], [0], [1], [0, 0, 1, 1], [], []>} : vector<16x512xbf16>, vector<512x32xbf16>, vector<16x32xf32> -> vector<16x32xf32>
    %16 = arith.addf %12, %15 : vector<16x32xf32>
    %c0_12 = arith.constant 0 : index
    %c0_13 = arith.constant 0 : index
    %17 = vector.load %arg10[%c0_12, %c0_13] : memref<16x32xf32, #tpu.memory_space<vmem>>, vector<16x32xf32>
    tpu.vector_store %arg10[%c0_12, %c0_13], %16 {strides = array<i32>} : memref<16x32xf32, #tpu.memory_space<vmem>>, vector<16x32xf32>,
    %c3_i32 = arith.constant 3 : i32
    %18 = arith.cmpi eq, %arg1, %c3_i32 : i32
    %19 = arith.extui %18 : i1 to i32
    %c0_i32_14 = arith.constant 0 : i32
    %20 = arith.cmpi ne, %19, %c0_i32_14 : i32
    scf.if %20 {
      %c0_15 = arith.constant 0 : index
      %c0_16 = arith.constant 0 : index
      %21 = vector.load %arg10[%c0_15, %c0_16] : memref<16x32xf32, #tpu.memory_space<vmem>>, vector<16x32xf32>
      %22 = arith.addf %3, %21 : vector<16x32xf32>
      %c0_17 = arith.constant 0 : index
      %c0_18 = arith.constant 0 : index
      %23 = vector.load %arg6[%c0_17, %c0_18] : memref<1x32xf32, #tpu.memory_space<vmem>>, vector<1x32xf32>
      %24 = vector.broadcast %23 : vector<1x32xf32> to vector<16x32xf32>
      %25 = arith.addf %22, %24 : vector<16x32xf32>
      %cst_19 = arith.constant dense<0.000000e+00> : vector<16xf32>
      %26 = vector.multi_reduction <add>, %25, %cst_19 [1] : vector<16x32xf32> to vector<16xf32>
      %27 = vector.shape_cast %26 : vector<16xf32> to vector<16x1xf32>
      %cst_20 = arith.constant 3.200000e+01 : f32
      %28 = vector.broadcast %cst_20 : f32 to vector<16x1xf32>
      %29 = arith.divf %27, %28 : vector<16x1xf32>
      %30 = vector.broadcast %29 : vector<16x1xf32> to vector<16x32xf32>
      %31 = arith.subf %25, %30 : vector<16x32xf32>
      %32 = arith.mulf %31, %31 : vector<16x32xf32>
      %cst_21 = arith.constant dense<0.000000e+00> : vector<16xf32>
      %33 = vector.multi_reduction <add>, %32, %cst_21 [1] : vector<16x32xf32> to vector<16xf32>
      %34 = vector.shape_cast %33 : vector<16xf32> to vector<16x1xf32>
      %cst_22 = arith.constant 3.200000e+01 : f32
      %35 = vector.broadcast %cst_22 : f32 to vector<16x1xf32>
      %36 = arith.divf %34, %35 : vector<16x1xf32>
      %cst_23 = arith.constant 9.99999974E-6 : f32
      %37 = vector.broadcast %cst_23 : f32 to vector<16x1xf32>
      %38 = arith.addf %36, %37 : vector<16x1xf32>
      %39 = math.rsqrt %38 : vector<16x1xf32>
      %40 = vector.broadcast %39 : vector<16x1xf32> to vector<16x32xf32>
      %41 = arith.mulf %31, %40 : vector<16x32xf32>
      %c0_24 = arith.constant 0 : index
      %c0_25 = arith.constant 0 : index
      %42 = vector.load %arg7[%c0_24, %c0_25] : memref<1x32xf32, #tpu.memory_space<vmem>>, vector<1x32xf32>
      %43 = vector.broadcast %42 : vector<1x32xf32> to vector<16x32xf32>
      %44 = arith.mulf %41, %43 : vector<16x32xf32>
      %c0_26 = arith.constant 0 : index
      %c0_27 = arith.constant 0 : index
      %45 = vector.load %arg8[%c0_26, %c0_27] : memref<1x32xf32, #tpu.memory_space<vmem>>, vector<1x32xf32>
      %46 = vector.broadcast %45 : vector<1x32xf32> to vector<16x32xf32>
      %47 = arith.addf %44, %46 : vector<16x32xf32>
      %c0_28 = arith.constant 0 : index
      %c0_29 = arith.constant 0 : index
      %48 = vector.load %arg9[%c0_28, %c0_29] : memref<16x32xf32, #tpu.memory_space<vmem>>, vector<16x32xf32>
      tpu.vector_store %arg9[%c0_28, %c0_29], %47 {strides = array<i32>} : memref<16x32xf32, #tpu.memory_space<vmem>>, vector<16x32xf32>,
    } else {
    }
    return
  }
  func.func @transform_0(%arg0: i32, %arg1: i32) -> (i32, i32) {
    %c0_i32 = arith.constant 0 : i32
    %c0_i32_0 = arith.constant 0 : i32
    return %arg0, %c0_i32 : i32, i32
  }
  func.func @transform_1(%arg0: i32, %arg1: i32) -> (i32, i32) {
    %c0_i32 = arith.constant 0 : i32
    %c0_i32_0 = arith.constant 0 : i32
    return %c0_i32, %arg1 : i32, i32
  }
  func.func @transform_2(%arg0: i32, %arg1: i32) -> (i32, i32) {
    %c0_i32 = arith.constant 0 : i32
    %c0_i32_0 = arith.constant 0 : i32
    return %c0_i32, %arg1 : i32, i32
  }
  func.func @transform_3(%arg0: i32, %arg1: i32) -> (i32, i32) {
    %c0_i32 = arith.constant 0 : i32
    %c0_i32_0 = arith.constant 0 : i32
    return %arg1, %c0_i32 : i32, i32
  }
  func.func @transform_4(%arg0: i32, %arg1: i32) -> (i32, i32) {
    %c0_i32 = arith.constant 0 : i32
    %c0_i32_0 = arith.constant 0 : i32
    %c0_i32_1 = arith.constant 0 : i32
    return %c0_i32, %c0_i32_0 : i32, i32
  }
  func.func @transform_5(%arg0: i32, %arg1: i32) -> (i32, i32) {
    %c0_i32 = arith.constant 0 : i32
    %c0_i32_0 = arith.constant 0 : i32
    %c0_i32_1 = arith.constant 0 : i32
    return %c0_i32, %c0_i32_0 : i32, i32
  }
  func.func @transform_6(%arg0: i32, %arg1: i32) -> (i32, i32) {
    %c0_i32 = arith.constant 0 : i32
    %c0_i32_0 = arith.constant 0 : i32
    %c0_i32_1 = arith.constant 0 : i32
    return %c0_i32, %c0_i32_0 : i32, i32
  }
  func.func @transform_7(%arg0: i32, %arg1: i32) -> (i32, i32) {
    %c0_i32 = arith.constant 0 : i32
    %c0_i32_0 = arith.constant 0 : i32
    return %arg0, %c0_i32 : i32, i32
  }
}

module attributes {stable_mosaic.version = 11 : i64} {
  func.func @_linear_kernel(%arg0: i32, %arg1: i32, %arg2: memref<16x32xf32, #tpu.memory_space<vmem>>, %arg3: memref<32x128xbf16, #tpu.memory_space<vmem>>, %arg4: memref<1x128xf32, #tpu.memory_space<vmem>>, %arg5: memref<16x128xf32, #tpu.memory_space<vmem>>) attributes {dimension_semantics = [#tpu.dimension_semantics<parallel>, #tpu.dimension_semantics<parallel>], iteration_bounds = array<i64: 1, 1>, scalar_prefetch = 0 : i64, scratch_operands = 0 : i64, tpu.core_type = #tpu.core_type<tc>, window_params = [{transform_indices = @transform_0, window_bounds = array<i64: 16, 32>}, {transform_indices = @transform_1, window_bounds = array<i64: 32, 128>}, {transform_indices = @transform_2, window_bounds = array<i64: 1, 128>}, {transform_indices = @transform_3, window_bounds = array<i64: 16, 128>}]} {
    %c0 = arith.constant 0 : index
    %c0_0 = arith.constant 0 : index
    %0 = vector.load %arg2[%c0, %c0_0] : memref<16x32xf32, #tpu.memory_space<vmem>>, vector<16x32xf32>
    %1 = arith.truncf %0 : vector<16x32xf32> to vector<16x32xbf16>
    %c0_1 = arith.constant 0 : index
    %c0_2 = arith.constant 0 : index
    %2 = vector.load %arg3[%c0_1, %c0_2] : memref<32x128xbf16, #tpu.memory_space<vmem>>, vector<32x128xbf16>
    %cst = arith.constant dense<0.000000e+00> : vector<16x128xf32>
    %3 = tpu.matmul %1, %2, %cst {dimension_numbers = #tpu.dot_dimension_numbers<[1], [0], [0], [1], [0, 0, 1, 1], [], []>} : vector<16x32xbf16>, vector<32x128xbf16>, vector<16x128xf32> -> vector<16x128xf32>
    %c0_3 = arith.constant 0 : index
    %c0_4 = arith.constant 0 : index
    %4 = vector.load %arg4[%c0_3, %c0_4] : memref<1x128xf32, #tpu.memory_space<vmem>>, vector<1x128xf32>
    %5 = vector.broadcast %4 : vector<1x128xf32> to vector<16x128xf32>
    %6 = arith.addf %3, %5 : vector<16x128xf32>
    %c0_5 = arith.constant 0 : index
    %c0_6 = arith.constant 0 : index
    %7 = vector.load %arg5[%c0_5, %c0_6] : memref<16x128xf32, #tpu.memory_space<vmem>>, vector<16x128xf32>
    tpu.vector_store %arg5[%c0_5, %c0_6], %6 {strides = array<i32>} : memref<16x128xf32, #tpu.memory_space<vmem>>, vector<16x128xf32>,
    return
  }
  func.func @transform_0(%arg0: i32, %arg1: i32) -> (i32, i32) {
    %c0_i32 = arith.constant 0 : i32
    %c0_i32_0 = arith.constant 0 : i32
    return %arg0, %c0_i32 : i32, i32
  }
  func.func @transform_1(%arg0: i32, %arg1: i32) -> (i32, i32) {
    %c0_i32 = arith.constant 0 : i32
    %c0_i32_0 = arith.constant 0 : i32
    return %c0_i32, %arg1 : i32, i32
  }
  func.func @transform_2(%arg0: i32, %arg1: i32) -> (i32, i32) {
    %c0_i32 = arith.constant 0 : i32
    %c0_i32_0 = arith.constant 0 : i32
    return %c0_i32, %arg1 : i32, i32
  }
  func.func @transform_3(%arg0: i32, %arg1: i32) -> (i32, i32) {
    %c0_i32 = arith.constant 0 : i32
    return %arg0, %arg1 : i32, i32
  }
}

</mosaic_0001>

<llo_original>
// kernel: transformer_predictor_forward.6
$region0: #{transformer_predictor_forward.6}
  #allocation0 [shape = 'u32[]', space=smem, size = 0x4, offset = 0x4, fixed_abs, tag = 'smem constant byte address 0x4 - core index']
  #allocation1 [shape = 'u32[144,128]{1,0:T(1,128)}', space=vmem, size = 0x12000, scoped, tag = 'internal scratch']
  %s0 = inlined_call_operand.vmem [shape: f32[16,16], index: 0, kind: input, shape index: {}]
  %s1 = inlined_call_operand.vmem [shape: bf16[16,128], index: 1, kind: input, shape index: {}]
  %s2 = inlined_call_operand.vmem [shape: f32[1,128], index: 2, kind: input, shape index: {}]
  %s3 = inlined_call_operand.vmem [shape: f32[16,128], index: 3, kind: output, shape index: {}]
  %s4 = sld [smem:[#allocation0]]
  $region22: #{transformer_predictor_forward.6} parent=0
    _
  %s6 = ssub.s32 1, %s4
  %s7 = scalar_select 0, %s6, %s4
  // Predicated region
  $region2: #{transformer_predictor_forward.6} parent=0 // pred_check
    _
  $region3: #{transformer_predictor_forward.6} parent=0 // pred_check_branch
    %9 = sbr.rel (0) target = $region5
  $region4: #{transformer_predictor_forward.6} parent=0 // pred_region
    _
  $region5: #{transformer_predictor_forward.6} parent=0 // pred_fallthru
    _
  // Predicated region
  $region6: #{transformer_predictor_forward.6} parent=0 // pred_check
    _
  $region7: #{transformer_predictor_forward.6} parent=0 // pred_check_branch
    %11 = sbr.rel (0) target = $region9
  $region8: #{transformer_predictor_forward.6} parent=0 // pred_region
    _
  $region9: #{transformer_predictor_forward.6} parent=0 // pred_fallthru
    _
  // Predicated region
  $region10: #{transformer_predictor_forward.6} parent=0 // pred_check
    _
  $region11: #{transformer_predictor_forward.6} parent=0 // pred_check_branch
    %13 = sbr.rel (0) target = $region13
  $region12: #{transformer_predictor_forward.6} parent=0 // pred_region
    _
  $region13: #{transformer_predictor_forward.6} parent=0 // pred_fallthru
    _
  %v15 = vld [vmem:[%s0] sm:$0xff]
  %v16 = vld [vmem:[%s0 + $0x8] sm:$0xff]
  %v17 = vpack.c.bf16 %v16, %v15
  %v18 = vld [vmem:[%s1] sm:$0xf]
  %v19 = vld [vmem:[%s1 + $0x4] sm:$0xf]
  %v20 = vld [vmem:[%s2] sm:$0x1]
  %v22 = vlaneseq
  %v23 = vshrl.u32 %v22, 7
  %v24 = vsub.s32 0, %v23
  %v25 = vrot.slane %v20, %v24
  %v29 = vunpack.c.l.b16 %v18
  %v30 = vunpack.c.l.b16 %v19
  %v31 = vpack.c.b16 %v30, %v29
  %vm33 = vcmask 130048
  %v35 = vsel %vm33, %v17, 0
  %37 = vmatprep.subr.bf16.mxu0 0
  %38 = vmatpush1.bf16.msra.mxu0 0
  %39 = vmatprep.subr.bf16.mxu0 0
  %40 = vmatpush1.bf16.msra.mxu0 0
  %41 = vmatprep.subr.bf16.mxu0 0
  %42 = vmatpush1.bf16.msra.mxu0 0
  %43 = vmatprep.subr.bf16.mxu0 0
  %44 = vmatpush1.bf16.msra.mxu0 0
  %45 = vmatprep.subr.bf16.mxu0 0
  %46 = vmatpush1.bf16.msra.mxu0 0
  %47 = vmatprep.subr.bf16.mxu0 0
  %48 = vmatpush1.bf16.msra.mxu0 0
  %49 = vmatprep.subr.bf16.mxu0 0
  %50 = vmatpush1.bf16.msra.mxu0 0
  %51 = vmatprep.subr.bf16.mxu0 0
  %52 = vmatpush1.bf16.msra.mxu0 %v31
  %53 = vmatprep.subr.bf16.mxu0 0
  %54 = vmatpush2.bf16.msra.mxu0 0
  %55 = vmatprep.subr.bf16.mxu0 0
  %56 = vmatpush2.bf16.msra.mxu0 0
  %57 = vmatprep.subr.bf16.mxu0 0
  %58 = vmatpush2.bf16.msra.mxu0 0
  %59 = vmatprep.subr.bf16.mxu0 0
  %60 = vmatpush2.bf16.msra.mxu0 0
  %61 = vmatprep.subr.bf16.mxu0 0
  %62 = vmatpush2.bf16.msra.mxu0 0
  %63 = vmatprep.subr.bf16.mxu0 0
  %64 = vmatpush2.bf16.msra.mxu0 0
  %65 = vmatprep.subr.bf16.mxu0 0
  %66 = vmatpush2.bf16.msra.mxu0 0
  %67 = vmatprep.subr.bf16.mxu0 0
  %68 = vmatpush2.bf16.msra.mxu0 0
  %69 = vmatprep.mubr.bf16.mxu0 0
  %70 = vmatmul.mubr.bf16.gmra.mxu0 %v35
  %v71 = vpop.f32.mrf.mxu0
  %v72 = vadd.f32 %v25, %v71
  %v73 = vpop.f32.mrf.mxu0
  %v74 = vpop.f32.mrf.mxu0
  %v75 = vadd.f32 %v25, %v74
  %v76 = vpop.f32.mrf.mxu0
  %77 = vdwg.mxu0
  %78 = vst [vmem:[%s3] sm:$0xff] %v72
  %79 = vst [vmem:[%s3 + $0x8] sm:$0xff] %v75
  // Predicated region
  $region14: #{transformer_predictor_forward.6} parent=0 // pred_check
    _
  $region15: #{transformer_predictor_forward.6} parent=0 // pred_check_branch
    %81 = sbr.rel (0) target = $region17
  $region16: #{transformer_predictor_forward.6} parent=0 // pred_region
    _
  $region17: #{transformer_predictor_forward.6} parent=0 // pred_fallthru
    _
  // Predicated region
  $region18: #{transformer_predictor_forward.6} parent=0 // pred_check
    _
  $region19: #{transformer_predictor_forward.6} parent=0 // pred_check_branch
    %83 = sbr.rel (0) target = $region21
  $region20: #{transformer_predictor_forward.6} parent=0 // pred_region
    _
  $region21: #{transformer_predictor_forward.6} parent=0 // pred_fallthru
    _

// kernel: transformer_predictor_forward.7
$region0: #{transformer_predictor_forward.7}
  #allocation0 [shape = 'u32[]', space=smem, size = 0x4, offset = 0x4, fixed_abs, tag = 'smem constant byte address 0x4 - core index']
  #allocation1 [shape = 'u32[144,128]{1,0:T(1,128)}', space=vmem, size = 0x12000, scoped, tag = 'internal scratch']
  %s0 = inlined_call_operand.vmem [shape: f32[16,32], index: 0, kind: input, shape index: {}]
  %s1 = inlined_call_operand.vmem [shape: s32[16,1], index: 1, kind: input, shape index: {}]
  %s2 = inlined_call_operand.vmem [shape: s32[1,16], index: 2, kind: input, shape index: {}]
  %s3 = inlined_call_operand.vmem [shape: bf16[32,96], index: 3, kind: input, shape index: {}]
  %s4 = inlined_call_operand.vmem [shape: f32[1,96], index: 4, kind: input, shape index: {}]
  %s5 = inlined_call_operand.vmem [shape: bf16[32,32], index: 5, kind: input, shape index: {}]
  %s6 = inlined_call_operand.vmem [shape: f32[1,32], index: 6, kind: input, shape index: {}]
  %s7 = inlined_call_operand.vmem [shape: f32[1,32], index: 7, kind: input, shape index: {}]
  %s8 = inlined_call_operand.vmem [shape: f32[1,32], index: 8, kind: input, shape index: {}]
  %s9 = inlined_call_operand.vmem [shape: f32[16,32], index: 9, kind: output, shape index: {}]
  %s10 = sld [smem:[#allocation0]]
  $region46: #{transformer_predictor_forward.7} parent=0
    _
  %s12 = ssub.s32 1, %s10
  %s13 = scalar_select 0, %s12, %s10
  // Predicated region
  $region2: #{transformer_predictor_forward.7} parent=0 // pred_check
    _
  $region3: #{transformer_predictor_forward.7} parent=0 // pred_check_branch
    %15 = sbr.rel (0) target = $region5
  $region4: #{transformer_predictor_forward.7} parent=0 // pred_region
    _
  $region5: #{transformer_predictor_forward.7} parent=0 // pred_fallthru
    _
  // Predicated region
  $region6: #{transformer_predictor_forward.7} parent=0 // pred_check
    _
  $region7: #{transformer_predictor_forward.7} parent=0 // pred_check_branch
    %17 = sbr.rel (0) target = $region9
  $region8: #{transformer_predictor_forward.7} parent=0 // pred_region
    _
  $region9: #{transformer_predictor_forward.7} parent=0 // pred_fallthru
    _
  // Predicated region
  $region10: #{transformer_predictor_forward.7} parent=0 // pred_check
    _
  $region11: #{transformer_predictor_forward.7} parent=0 // pred_check_branch
    %19 = sbr.rel (0) target = $region13
  $region12: #{transformer_predictor_forward.7} parent=0 // pred_region
    _
  $region13: #{transformer_predictor_forward.7} parent=0 // pred_fallthru
    _
  // Predicated region
  $region14: #{transformer_predictor_forward.7} parent=0 // pred_check
    _
  $region15: #{transformer_predictor_forward.7} parent=0 // pred_check_branch
    %21 = sbr.rel (0) target = $region17
  $region16: #{transformer_predictor_forward.7} parent=0 // pred_region
    _
  $region17: #{transformer_predictor_forward.7} parent=0 // pred_fallthru
    _
  // Predicated region
  $region18: #{transformer_predictor_forward.7} parent=0 // pred_check
    _
  $region19: #{transformer_predictor_forward.7} parent=0 // pred_check_branch
    %23 = sbr.rel (0) target = $region21
  $region20: #{transformer_predictor_forward.7} parent=0 // pred_region
    _
  $region21: #{transformer_predictor_forward.7} parent=0 // pred_fallthru
    _
  // Predicated region
  $region22: #{transformer_predictor_forward.7} parent=0 // pred_check
    _
  $region23: #{transformer_predictor_forward.7} parent=0 // pred_check_branch
    %25 = sbr.rel (0) target = $region25
  $region24: #{transformer_predictor_forward.7} parent=0 // pred_region
    _
  $region25: #{transformer_predictor_forward.7} parent=0 // pred_fallthru
    _
  // Predicated region
  $region26: #{transformer_predictor_forward.7} parent=0 // pred_check
    _
  $region27: #{transformer_predictor_forward.7} parent=0 // pred_check_branch
    %27 = sbr.rel (0) target = $region29
  $region28: #{transformer_predictor_forward.7} parent=0 // pred_region
    _
  $region29: #{transformer_predictor_forward.7} parent=0 // pred_fallthru
    _
  // Predicated region
  $region30: #{transformer_predictor_forward.7} parent=0 // pred_check
    _
  $region31: #{transformer_predictor_forward.7} parent=0 // pred_check_branch
    %29 = sbr.rel (0) target = $region33
  $region32: #{transformer_predictor_forward.7} parent=0 // pred_region
    _
  $region33: #{transformer_predictor_forward.7} parent=0 // pred_fallthru
    _
  // Predicated region
  $region34: #{transformer_predictor_forward.7} parent=0 // pred_check
    _
  $region35: #{transformer_predictor_forward.7} parent=0 // pred_check_branch
    %31 = sbr.rel (0) target = $region37
  $region36: #{transformer_predictor_forward.7} parent=0 // pred_region
    _
  $region37: #{transformer_predictor_forward.7} parent=0 // pred_fallthru
    _
  %v33 = vld [vmem:[%s0] sm:$0xff]
  %v34 = vld [vmem:[%s0 + $0x8] sm:$0xff]
  %v35 = vpack.c.bf16 %v34, %v33
  %v36 = vld [vmem:[%s3] sm:$0xf]
  %v37 = vld [vmem:[%s3 + $0x4] sm:$0xf]
  %v38 = vld [vmem:[%s3 + $0x8] sm:$0xf]
  %v39 = vld [vmem:[%s3 + $0xc] sm:$0xf]
  %v40 = vld [vmem:[%s4] sm:$0x1]
  %v42 = vlaneseq
  %v43 = vshrl.u32 %v42, 7
  %v44 = vsub.s32 0, %v43
  %v45 = vrot.slane %v40, %v44
  %v51 = vunpack.c.l.b16 %v36
  %v52 = vunpack.c.l.b16 %v37
  %v53 = vunpack.c.l.b16 %v38
  %v54 = vunpack.c.l.b16 %v39
  %v55 = vpack.c.b16 %v52, %v51
  %v56 = vpack.c.b16 %v54, %v53
  %vm59 = vcmask 261120
  %v61 = vsel %vm59, %v35, 0
  %63 = vmatprep.subr.bf16.mxu0 0
  %64 = vmatpush1.bf16.msra.mxu0 0
  %65 = vmatprep.subr.bf16.mxu0 0
  %66 = vmatpush1.bf16.msra.mxu0 0
  %67 = vmatprep.subr.bf16.mxu0 0
  %68 = vmatpush1.bf16.msra.mxu0 0
  %69 = vmatprep.subr.bf16.mxu0 0
  %70 = vmatpush1.bf16.msra.mxu0 0
  %71 = vmatprep.subr.bf16.mxu0 0
  %72 = vmatpush1.bf16.msra.mxu0 0
  %73 = vmatprep.subr.bf16.mxu0 0
  %74 = vmatpush1.bf16.msra.mxu0 0
  %75 = vmatprep.subr.bf16.mxu0 0
  %76 = vmatpush1.bf16.msra.mxu0 %v56
  %77 = vmatprep.subr.bf16.mxu0 0
  %78 = vmatpush1.bf16.msra.mxu0 %v55
  %79 = vmatprep.subr.bf16.mxu0 0
  %80 = vmatpush2.bf16.msra.mxu0 0
  %81 = vmatprep.subr.bf16.mxu0 0
  %82 = vmatpush2.bf16.msra.mxu0 0
  %83 = vmatprep.subr.bf16.mxu0 0
  %84 = vmatpush2.bf16.msra.mxu0 0
  %85 = vmatprep.subr.bf16.mxu0 0
  %86 = vmatpush2.bf16.msra.mxu0 0
  %87 = vmatprep.subr.bf16.mxu0 0
  %88 = vmatpush2.bf16.msra.mxu0 0
  %89 = vmatprep.subr.bf16.mxu0 0
  %90 = vmatpush2.bf16.msra.mxu0 0
  %91 = vmatprep.subr.bf16.mxu0 0
  %92 = vmatpush2.bf16.msra.mxu0 0
  %93 = vmatprep.subr.bf16.mxu0 0
  %94 = vmatpush2.bf16.msra.mxu0 0
  %95 = vmatprep.mubr.bf16.mxu0 0
  %96 = vmatmul.mubr.bf16.gmra.mxu0 %v61
  %v97 = vpop.f32.mrf.mxu0
  %v98 = vadd.f32 %v45, %v97
  %v99 = vpop.f32.mrf.mxu0
  %v100 = vpop.f32.mrf.mxu0
  %v101 = vadd.f32 %v45, %v100
  %v102 = vpop.f32.mrf.mxu0
  %103 = vdwg.mxu0
  %v104 = vld [vmem:[%s1] sm:$0xff]
  %v105 = vld [vmem:[%s1 + $0x8] sm:$0xff]
  %v106 = vld [vmem:[%s2] sm:$0x1]
  %107 = vset.pattern.permute.xlu0 0
  %108 = vperm.xlu0 %107, %v104
  %v109 = vpop.permute.xlu0 %108
  %110 = vset.pattern.permute.xlu0 0
  %111 = vperm.xlu0 %110, %v105
  %v112 = vpop.permute.xlu0 %111
  %v113 = vlaneseq
  %v114 = vshrl.u32 %v113, 7
  %v115 = vsub.s32 0, %v114
  %v116 = vrot.slane %v106, %v115
  %vm117 = vcmp.eq.s32.totalorder %v109, %v116
  %vm118 = vcmp.eq.s32.totalorder %v112, %v116
  %v119 = vpack.c.bf16 %v101, %v98
  %121 = vrot.lane.b32.xlu0 %v119, 96
  %v122 = vpop.permute.xlu0 %121
  %vm123 = vcmask 64512
  %v125 = vsel %vm123, %v119, 0
  %v128 = vsel %vm123, %v122, 0
  %130 = vmatprep.subr.bf16.mxu0 0
  %131 = vmatpush1.bf16.xpose.msra.mxu0 0
  %132 = vmatprep.subr.bf16.mxu0 0
  %133 = vmatpush1.bf16.xpose.msra.mxu0 0
  %134 = vmatprep.subr.bf16.mxu0 0
  %135 = vmatpush1.bf16.xpose.msra.mxu0 0
  %136 = vmatprep.subr.bf16.mxu0 0
  %137 = vmatpush1.bf16.xpose.msra.mxu0 0
  %138 = vmatprep.subr.bf16.mxu0 0
  %139 = vmatpush1.bf16.xpose.msra.mxu0 0
  %140 = vmatprep.subr.bf16.mxu0 0
  %141 = vmatpush1.bf16.xpose.msra.mxu0 0
  %142 = vmatprep.subr.bf16.mxu0 0
  %143 = vmatpush1.bf16.xpose.msra.mxu0 0
  %144 = vmatprep.subr.bf16.mxu0 0
  %145 = vmatpush1.bf16.xpose.msra.mxu0 %v128
  %146 = vmatprep.subr.bf16.mxu0 0
  %147 = vmatpush2.bf16.xpose.msra.mxu0 0
  %148 = vmatprep.subr.bf16.mxu0 0
  %149 = vmatpush2.bf16.xpose.msra.mxu0 0
  %150 = vmatprep.subr.bf16.mxu0 0
  %151 = vmatpush2.bf16.xpose.msra.mxu0 0
  %152 = vmatprep.subr.bf16.mxu0 0
  %153 = vmatpush2.bf16.xpose.msra.mxu0 0
  %154 = vmatprep.subr.bf16.mxu0 0
  %155 = vmatpush2.bf16.xpose.msra.mxu0 0
  %156 = vmatprep.subr.bf16.mxu0 0
  %157 = vmatpush2.bf16.xpose.msra.mxu0 0
  %158 = vmatprep.subr.bf16.mxu0 0
  %159 = vmatpush2.bf16.xpose.msra.mxu0 0
  %160 = vmatprep.subr.bf16.mxu0 0
  %161 = vmatpush2.bf16.xpose.msra.mxu0 0
  %162 = vmatprep.mubr.bf16.mxu0 0
  %163 = vmatmul.mubr.bf16.gmra.mxu0 %v125
  %v164 = vpop.f32.mrf.mxu0
  %v165 = vadd.f32 0.0, %v164
  %v166 = vpop.f32.mrf.mxu0
  %v167 = vpop.f32.mrf.mxu0
  %v168 = vadd.f32 0.0, %v167
  %v169 = vpop.f32.mrf.mxu0
  %170 = vdwg.mxu0
  %v171 = vmul.f32 %v165, 0.35355338
  %v172 = vmul.f32 %v168, 0.35355338
  %v173 = vsel %vm117, %v171, -1e+30
  %v174 = vsel %vm118, %v172, -1e+30
  %vm175 = vcmask 130048
  %v176 = vsel %vm175, %v173, -inf
  %177 = vmax.xlane.f32.xlu0 %v176
  %v178 = vpop.xlane.xlu0 %177
  %v179 = vsel %vm175, %v174, -inf
  %180 = vmax.xlane.f32.xlu0 %v179
  %v181 = vpop.xlane.xlu0 %180
  %v182 = vsub.f32 %v173, %v178
  %v183 = vsub.f32 %v174, %v181
  %v184 = vmul.f32 %v182, 1.442695
  %v185 = vpow.pop %v184
  %v186 = vmul.f32 %v183, 1.442695
  %v187 = vpow.pop %v186
  %v188 = vsel %vm175, %v185, 0.0
  %189 = vadd.xlane.f32.xlu0 %v188
  %v190 = vpop.xlane.xlu0 %189
  %v191 = vsel %vm175, %v187, 0.0
  %192 = vadd.xlane.f32.xlu0 %v191
  %v193 = vpop.xlane.xlu0 %192
  %v194 = vrcp.pop %v190
  %v195 = vrcp.pop %v193
  %v196 = vmul.f32 %v185, %v194
  %v197 = vmul.f32 %v187, %v195
  %v198 = vpack.c.bf16 %v197, %v196
  %199 = vrot.lane.b32.xlu0 %v119, 64
  %v200 = vpop.permute.xlu0 %199
  %v203 = vsel %vm175, %v198, 0
  %205 = vmatprep.subr.bf16.mxu0 0
  %206 = vmatpush1.bf16.msra.mxu0 0
  %207 = vmatprep.subr.bf16.mxu0 0
  %208 = vmatpush1.bf16.msra.mxu0 0
  %209 = vmatprep.subr.bf16.mxu0 0
  %210 = vmatpush1.bf16.msra.mxu0 0
  %211 = vmatprep.subr.bf16.mxu0 0
  %212 = vmatpush1.bf16.msra.mxu0 0
  %213 = vmatprep.subr.bf16.mxu0 0
  %214 = vmatpush1.bf16.msra.mxu0 0
  %215 = vmatprep.subr.bf16.mxu0 0
  %216 = vmatpush1.bf16.msra.mxu0 0
  %217 = vmatprep.subr.bf16.mxu0 0
  %218 = vmatpush1.bf16.msra.mxu0 0
  %219 = vmatprep.subr.bf16.mxu0 0
  %220 = vmatpush1.bf16.msra.mxu0 %v200
  %221 = vmatprep.subr.bf16.mxu0 0
  %222 = vmatpush2.bf16.msra.mxu0 0
  %223 = vmatprep.subr.bf16.mxu0 0
  %224 = vmatpush2.bf16.msra.mxu0 0
  %225 = vmatprep.subr.bf16.mxu0 0
  %226 = vmatpush2.bf16.msra.mxu0 0
  %227 = vmatprep.subr.bf16.mxu0 0
  %228 = vmatpush2.bf16.msra.mxu0 0
  %229 = vmatprep.subr.bf16.mxu0 0
  %230 = vmatpush2.bf16.msra.mxu0 0
  %231 = vmatprep.subr.bf16.mxu0 0
  %232 = vmatpush2.bf16.msra.mxu0 0
  %233 = vmatprep.subr.bf16.mxu0 0
  %234 = vmatpush2.bf16.msra.mxu0 0
  %235 = vmatprep.subr.bf16.mxu0 0
  %236 = vmatpush2.bf16.msra.mxu0 0
  %237 = vmatprep.mubr.bf16.mxu0 0
  %238 = vmatmul.mubr.bf16.gmra.mxu0 %v203
  %v239 = vpop.f32.mrf.mxu0
  %v240 = vadd.f32 0.0, %v239
  %v241 = vpop.f32.mrf.mxu0
  %v242 = vpop.f32.mrf.mxu0
  %v243 = vadd.f32 0.0, %v242
  %v244 = vpop.f32.mrf.mxu0
  %245 = vdwg.mxu0
  %246 = vrot.lane.b32.xlu0 %v119, 120
  %v247 = vpop.permute.xlu0 %246
  %248 = vrot.lane.b32.xlu0 %v119, 88
  %v249 = vpop.permute.xlu0 %248
  %v251 = vsel %vm123, %v247, 0
  %v254 = vsel %vm123, %v249, 0
  %256 = vmatprep.subr.bf16.mxu0 0
  %257 = vmatpush1.bf16.xpose.msra.mxu0 0
  %258 = vmatprep.subr.bf16.mxu0 0
  %259 = vmatpush1.bf16.xpose.msra.mxu0 0
  %260 = vmatprep.subr.bf16.mxu0 0
  %261 = vmatpush1.bf16.xpose.msra.mxu0 0
  %262 = vmatprep.subr.bf16.mxu0 0
  %263 = vmatpush1.bf16.xpose.msra.mxu0 0
  %264 = vmatprep.subr.bf16.mxu0 0
  %265 = vmatpush1.bf16.xpose.msra.mxu0 0
  %266 = vmatprep.subr.bf16.mxu0 0
  %267 = vmatpush1.bf16.xpose.msra.mxu0 0
  %268 = vmatprep.subr.bf16.mxu0 0
  %269 = vmatpush1.bf16.xpose.msra.mxu0 0
  %270 = vmatprep.subr.bf16.mxu0 0
  %271 = vmatpush1.bf16.xpose.msra.mxu0 %v254
  %272 = vmatprep.subr.bf16.mxu0 0
  %273 = vmatpush2.bf16.xpose.msra.mxu0 0
  %274 = vmatprep.subr.bf16.mxu0 0
  %275 = vmatpush2.bf16.xpose.msra.mxu0 0
  %276 = vmatprep.subr.bf16.mxu0 0
  %277 = vmatpush2.bf16.xpose.msra.mxu0 0
  %278 = vmatprep.subr.bf16.mxu0 0
  %279 = vmatpush2.bf16.xpose.msra.mxu0 0
  %280 = vmatprep.subr.bf16.mxu0 0
  %281 = vmatpush2.bf16.xpose.msra.mxu0 0
  %282 = vmatprep.subr.bf16.mxu0 0
  %283 = vmatpush2.bf16.xpose.msra.mxu0 0
  %284 = vmatprep.subr.bf16.mxu0 0
  %285 = vmatpush2.bf16.xpose.msra.mxu0 0
  %286 = vmatprep.subr.bf16.mxu0 0
  %287 = vmatpush2.bf16.xpose.msra.mxu0 0
  %288 = vmatprep.mubr.bf16.mxu0 0
  %289 = vmatmul.mubr.bf16.gmra.mxu0 %v251
  %v290 = vpop.f32.mrf.mxu0
  %v291 = vadd.f32 0.0, %v290
  %v292 = vpop.f32.mrf.mxu0
  %v293 = vpop.f32.mrf.mxu0
  %v294 = vadd.f32 0.0, %v293
  %v295 = vpop.f32.mrf.mxu0
  %296 = vdwg.mxu0
  %v297 = vmul.f32 %v291, 0.35355338
  %v298 = vmul.f32 %v294, 0.35355338
  %v299 = vsel %vm117, %v297, -1e+30
  %v300 = vsel %vm118, %v298, -1e+30
  %v301 = vsel %vm175, %v299, -inf
  %302 = vmax.xlane.f32.xlu0 %v301
  %v303 = vpop.xlane.xlu0 %302
  %v304 = vsel %vm175, %v300, -inf
  %305 = vmax.xlane.f32.xlu0 %v304
  %v306 = vpop.xlane.xlu0 %305
  %v307 = vsub.f32 %v299, %v303
  %v308 = vsub.f32 %v300, %v306
  %v309 = vmul.f32 %v307, 1.442695
  %v310 = vpow.pop %v309
  %v311 = vmul.f32 %v308, 1.442695
  %v312 = vpow.pop %v311
  %v313 = vsel %vm175, %v310, 0.0
  %314 = vadd.xlane.f32.xlu0 %v313
  %v315 = vpop.xlane.xlu0 %314
  %v316 = vsel %vm175, %v312, 0.0
  %317 = vadd.xlane.f32.xlu0 %v316
  %v318 = vpop.xlane.xlu0 %317
  %v319 = vrcp.pop %v315
  %v320 = vrcp.pop %v318
  %v321 = vmul.f32 %v310, %v319
  %v322 = vmul.f32 %v312, %v320
  %v323 = vpack.c.bf16 %v322, %v321
  %324 = vrot.lane.b32.xlu0 %v119, 56
  %v325 = vpop.permute.xlu0 %324
  %v328 = vsel %vm175, %v323, 0
  %330 = vmatprep.subr.bf16.mxu0 0
  %331 = vmatpush1.bf16.msra.mxu0 0
  %332 = vmatprep.subr.bf16.mxu0 0
  %333 = vmatpush1.bf16.msra.mxu0 0
  %334 = vmatprep.subr.bf16.mxu0 0
  %335 = vmatpush1.bf16.msra.mxu0 0
  %336 = vmatprep.subr.bf16.mxu0 0
  %337 = vmatpush1.bf16.msra.mxu0 0
  %338 = vmatprep.subr.bf16.mxu0 0
  %339 = vmatpush1.bf16.msra.mxu0 0
  %340 = vmatprep.subr.bf16.mxu0 0
  %341 = vmatpush1.bf16.msra.mxu0 0
  %342 = vmatprep.subr.bf16.mxu0 0
  %343 = vmatpush1.bf16.msra.mxu0 0
  %344 = vmatprep.subr.bf16.mxu0 0
  %345 = vmatpush1.bf16.msra.mxu0 %v325
  %346 = vmatprep.subr.bf16.mxu0 0
  %347 = vmatpush2.bf16.msra.mxu0 0
  %348 = vmatprep.subr.bf16.mxu0 0
  %349 = vmatpush2.bf16.msra.mxu0 0
  %350 = vmatprep.subr.bf16.mxu0 0
  %351 = vmatpush2.bf16.msra.mxu0 0
  %352 = vmatprep.subr.bf16.mxu0 0
  %353 = vmatpush2.bf16.msra.mxu0 0
  %354 = vmatprep.subr.bf16.mxu0 0
  %355 = vmatpush2.bf16.msra.mxu0 0
  %356 = vmatprep.subr.bf16.mxu0 0
  %357 = vmatpush2.bf16.msra.mxu0 0
  %358 = vmatprep.subr.bf16.mxu0 0
  %359 = vmatpush2.bf16.msra.mxu0 0
  %360 = vmatprep.subr.bf16.mxu0 0
  %361 = vmatpush2.bf16.msra.mxu0 0
  %362 = vmatprep.mubr.bf16.mxu0 0
  %363 = vmatmul.mubr.bf16.gmra.mxu0 %v328
  %v364 = vpop.f32.mrf.mxu0
  %v365 = vadd.f32 0.0, %v364
  %v366 = vpop.f32.mrf.mxu0
  %v367 = vpop.f32.mrf.mxu0
  %v368 = vadd.f32 0.0, %v367
  %v369 = vpop.f32.mrf.mxu0
  %370 = vdwg.mxu0
  %371 = vrot.lane.b32.xlu0 %v119, 112
  %v372 = vpop.permute.xlu0 %371
  %373 = vrot.lane.b32.xlu0 %v119, 80
  %v374 = vpop.permute.xlu0 %373
  %v376 = vsel %vm123, %v372, 0
  %v379 = vsel %vm123, %v374, 0
  %381 = vmatprep.subr.bf16.mxu0 0
  %382 = vmatpush1.bf16.xpose.msra.mxu0 0
  %383 = vmatprep.subr.bf16.mxu0 0
  %384 = vmatpush1.bf16.xpose.msra.mxu0 0
  %385 = vmatprep.subr.bf16.mxu0 0
  %386 = vmatpush1.bf16.xpose.msra.mxu0 0
  %387 = vmatprep.subr.bf16.mxu0 0
  %388 = vmatpush1.bf16.xpose.msra.mxu0 0
  %389 = vmatprep.subr.bf16.mxu0 0
  %390 = vmatpush1.bf16.xpose.msra.mxu0 0
  %391 = vmatprep.subr.bf16.mxu0 0
  %392 = vmatpush1.bf16.xpose.msra.mxu0 0
  %393 = vmatprep.subr.bf16.mxu0 0
  %394 = vmatpush1.bf16.xpose.msra.mxu0 0
  %395 = vmatprep.subr.bf16.mxu0 0
  %396 = vmatpush1.bf16.xpose.msra.mxu0 %v379
  %397 = vmatprep.subr.bf16.mxu0 0
  %398 = vmatpush2.bf16.xpose.msra.mxu0 0
  %399 = vmatprep.subr.bf16.mxu0 0
  %400 = vmatpush2.bf16.xpose.msra.mxu0 0
  %401 = vmatprep.subr.bf16.mxu0 0
  %402 = vmatpush2.bf16.xpose.msra.mxu0 0
  %403 = vmatprep.subr.bf16.mxu0 0
  %404 = vmatpush2.bf16.xpose.msra.mxu0 0
  %405 = vmatprep.subr.bf16.mxu0 0
  %406 = vmatpush2.bf16.xpose.msra.mxu0 0
  %407 = vmatprep.subr.bf16.mxu0 0
  %408 = vmatpush2.bf16.xpose.msra.mxu0 0
  %409 = vmatprep.subr.bf16.mxu0 0
  %410 = vmatpush2.bf16.xpose.msra.mxu0 0
  %411 = vmatprep.subr.bf16.mxu0 0
  %412 = vmatpush2.bf16.xpose.msra.mxu0 0
  %413 = vmatprep.mubr.bf16.mxu0 0
  %414 = vmatmul.mubr.bf16.gmra.mxu0 %v376
  %v415 = vpop.f32.mrf.mxu0
  %v416 = vadd.f32 0.0, %v415
  %v417 = vpop.f32.mrf.mxu0
  %v418 = vpop.f32.mrf.mxu0
  %v419 = vadd.f32 0.0, %v418
  %v420 = vpop.f32.mrf.mxu0
  %421 = vdwg.mxu0
  %v422 = vmul.f32 %v416, 0.35355338
  %v423 = vmul.f32 %v419, 0.35355338
  %v424 = vsel %vm117, %v422, -1e+30
  %v425 = vsel %vm118, %v423, -1e+30
  %v426 = vsel %vm175, %v424, -inf
  %427 = vmax.xlane.f32.xlu0 %v426
  %v428 = vpop.xlane.xlu0 %427
  %v429 = vsel %vm175, %v425, -inf
  %430 = vmax.xlane.f32.xlu0 %v429
  %v431 = vpop.xlane.xlu0 %430
  %v432 = vsub.f32 %v424, %v428
  %v433 = vsub.f32 %v425, %v431
  %v434 = vmul.f32 %v432, 1.442695
  %v435 = vpow.pop %v434
  %v436 = vmul.f32 %v433, 1.442695
  %v437 = vpow.pop %v436
  %v438 = vsel %vm175, %v435, 0.0
  %439 = vadd.xlane.f32.xlu0 %v438
  %v440 = vpop.xlane.xlu0 %439
  %v441 = vsel %vm175, %v437, 0.0
  %442 = vadd.xlane.f32.xlu0 %v441
  %v443 = vpop.xlane.xlu0 %442
  %v444 = vrcp.pop %v440
  %v445 = vrcp.pop %v443
  %v446 = vmul.f32 %v435, %v444
  %v447 = vmul.f32 %v437, %v445
  %v448 = vpack.c.bf16 %v447, %v446
  %449 = vrot.lane.b32.xlu0 %v119, 48
  %v450 = vpop.permute.xlu0 %449
  %v453 = vsel %vm175, %v448, 0
  %455 = vmatprep.subr.bf16.mxu0 0
  %456 = vmatpush1.bf16.msra.mxu0 0
  %457 = vmatprep.subr.bf16.mxu0 0
  %458 = vmatpush1.bf16.msra.mxu0 0
  %459 = vmatprep.subr.bf16.mxu0 0
  %460 = vmatpush1.bf16.msra.mxu0 0
  %461 = vmatprep.subr.bf16.mxu0 0
  %462 = vmatpush1.bf16.msra.mxu0 0
  %463 = vmatprep.subr.bf16.mxu0 0
  %464 = vmatpush1.bf16.msra.mxu0 0
  %465 = vmatprep.subr.bf16.mxu0 0
  %466 = vmatpush1.bf16.msra.mxu0 0
  %467 = vmatprep.subr.bf16.mxu0 0
  %468 = vmatpush1.bf16.msra.mxu0 0
  %469 = vmatprep.subr.bf16.mxu0 0
  %470 = vmatpush1.bf16.msra.mxu0 %v450
  %471 = vmatprep.subr.bf16.mxu0 0
  %472 = vmatpush2.bf16.msra.mxu0 0
  %473 = vmatprep.subr.bf16.mxu0 0
  %474 = vmatpush2.bf16.msra.mxu0 0
  %475 = vmatprep.subr.bf16.mxu0 0
  %476 = vmatpush2.bf16.msra.mxu0 0
  %477 = vmatprep.subr.bf16.mxu0 0
  %478 = vmatpush2.bf16.msra.mxu0 0
  %479 = vmatprep.subr.bf16.mxu0 0
  %480 = vmatpush2.bf16.msra.mxu0 0
  %481 = vmatprep.subr.bf16.mxu0 0
  %482 = vmatpush2.bf16.msra.mxu0 0
  %483 = vmatprep.subr.bf16.mxu0 0
  %484 = vmatpush2.bf16.msra.mxu0 0
  %485 = vmatprep.subr.bf16.mxu0 0
  %486 = vmatpush2.bf16.msra.mxu0 0
  %487 = vmatprep.mubr.bf16.mxu0 0
  %488 = vmatmul.mubr.bf16.gmra.mxu0 %v453
  %v489 = vpop.f32.mrf.mxu0
  %v490 = vadd.f32 0.0, %v489
  %v491 = vpop.f32.mrf.mxu0
  %v492 = vpop.f32.mrf.mxu0
  %v493 = vadd.f32 0.0, %v492
  %v494 = vpop.f32.mrf.mxu0
  %495 = vdwg.mxu0
  %496 = vrot.lane.b32.xlu0 %v119, 104
  %v497 = vpop.permute.xlu0 %496
  %498 = vrot.lane.b32.xlu0 %v119, 72
  %v499 = vpop.permute.xlu0 %498
  %v501 = vsel %vm123, %v497, 0
  %v504 = vsel %vm123, %v499, 0
  %506 = vmatprep.subr.bf16.mxu0 0
  %507 = vmatpush1.bf16.xpose.msra.mxu0 0
  %508 = vmatprep.subr.bf16.mxu0 0
  %509 = vmatpush1.bf16.xpose.msra.mxu0 0
  %510 = vmatprep.subr.bf16.mxu0 0
  %511 = vmatpush1.bf16.xpose.msra.mxu0 0
  %512 = vmatprep.subr.bf16.mxu0 0
  %513 = vmatpush1.bf16.xpose.msra.mxu0 0
  %514 = vmatprep.subr.bf16.mxu0 0
  %515 = vmatpush1.bf16.xpose.msra.mxu0 0
  %516 = vmatprep.subr.bf16.mxu0 0
  %517 = vmatpush1.bf16.xpose.msra.mxu0 0
  %518 = vmatprep.subr.bf16.mxu0 0
  %519 = vmatpush1.bf16.xpose.msra.mxu0 0
  %520 = vmatprep.subr.bf16.mxu0 0
  %521 = vmatpush1.bf16.xpose.msra.mxu0 %v504
  %522 = vmatprep.subr.bf16.mxu0 0
  %523 = vmatpush2.bf16.xpose.msra.mxu0 0
  %524 = vmatprep.subr.bf16.mxu0 0
  %525 = vmatpush2.bf16.xpose.msra.mxu0 0
  %526 = vmatprep.subr.bf16.mxu0 0
  %527 = vmatpush2.bf16.xpose.msra.mxu0 0
  %528 = vmatprep.subr.bf16.mxu0 0
  %529 = vmatpush2.bf16.xpose.msra.mxu0 0
  %530 = vmatprep.subr.bf16.mxu0 0
  %531 = vmatpush2.bf16.xpose.msra.mxu0 0
  %532 = vmatprep.subr.bf16.mxu0 0
  %533 = vmatpush2.bf16.xpose.msra.mxu0 0
  %534 = vmatprep.subr.bf16.mxu0 0
  %535 = vmatpush2.bf16.xpose.msra.mxu0 0
  %536 = vmatprep.subr.bf16.mxu0 0
  %537 = vmatpush2.bf16.xpose.msra.mxu0 0
  %538 = vmatprep.mubr.bf16.mxu0 0
  %539 = vmatmul.mubr.bf16.gmra.mxu0 %v501
  %v540 = vpop.f32.mrf.mxu0
  %v541 = vadd.f32 0.0, %v540
  %v542 = vpop.f32.mrf.mxu0
  %v543 = vpop.f32.mrf.mxu0
  %v544 = vadd.f32 0.0, %v543
  %v545 = vpop.f32.mrf.mxu0
  %546 = vdwg.mxu0
  %v547 = vmul.f32 %v541, 0.35355338
  %v548 = vmul.f32 %v544, 0.35355338
  %v549 = vsel %vm117, %v547, -1e+30
  %v550 = vsel %vm118, %v548, -1e+30
  %v551 = vsel %vm175, %v549, -inf
  %552 = vmax.xlane.f32.xlu0 %v551
  %v553 = vpop.xlane.xlu0 %552
  %v554 = vsel %vm175, %v550, -inf
  %555 = vmax.xlane.f32.xlu0 %v554
  %v556 = vpop.xlane.xlu0 %555
  %v557 = vsub.f32 %v549, %v553
  %v558 = vsub.f32 %v550, %v556
  %v559 = vmul.f32 %v557, 1.442695
  %v560 = vpow.pop %v559
  %v561 = vmul.f32 %v558, 1.442695
  %v562 = vpow.pop %v561
  %v563 = vsel %vm175, %v560, 0.0
  %564 = vadd.xlane.f32.xlu0 %v563
  %v565 = vpop.xlane.xlu0 %564
  %v566 = vsel %vm175, %v562, 0.0
  %567 = vadd.xlane.f32.xlu0 %v566
  %v568 = vpop.xlane.xlu0 %567
  %v569 = vrcp.pop %v565
  %v570 = vrcp.pop %v568
  %v571 = vmul.f32 %v560, %v569
  %v572 = vmul.f32 %v562, %v570
  %v573 = vpack.c.bf16 %v572, %v571
  %574 = vrot.lane.b32.xlu0 %v119, 40
  %v575 = vpop.permute.xlu0 %574
  %v578 = vsel %vm175, %v573, 0
  %580 = vmatprep.subr.bf16.mxu0 0
  %581 = vmatpush1.bf16.msra.mxu0 0
  %582 = vmatprep.subr.bf16.mxu0 0
  %583 = vmatpush1.bf16.msra.mxu0 0
  %584 = vmatprep.subr.bf16.mxu0 0
  %585 = vmatpush1.bf16.msra.mxu0 0
  %586 = vmatprep.subr.bf16.mxu0 0
  %587 = vmatpush1.bf16.msra.mxu0 0
  %588 = vmatprep.subr.bf16.mxu0 0
  %589 = vmatpush1.bf16.msra.mxu0 0
  %590 = vmatprep.subr.bf16.mxu0 0
  %591 = vmatpush1.bf16.msra.mxu0 0
  %592 = vmatprep.subr.bf16.mxu0 0
  %593 = vmatpush1.bf16.msra.mxu0 0
  %594 = vmatprep.subr.bf16.mxu0 0
  %595 = vmatpush1.bf16.msra.mxu0 %v575
  %596 = vmatprep.subr.bf16.mxu0 0
  %597 = vmatpush2.bf16.msra.mxu0 0
  %598 = vmatprep.subr.bf16.mxu0 0
  %599 = vmatpush2.bf16.msra.mxu0 0
  %600 = vmatprep.subr.bf16.mxu0 0
  %601 = vmatpush2.bf16.msra.mxu0 0
  %602 = vmatprep.subr.bf16.mxu0 0
  %603 = vmatpush2.bf16.msra.mxu0 0
  %604 = vmatprep.subr.bf16.mxu0 0
  %605 = vmatpush2.bf16.msra.mxu0 0
  %606 = vmatprep.subr.bf16.mxu0 0
  %607 = vmatpush2.bf16.msra.mxu0 0
  %608 = vmatprep.subr.bf16.mxu0 0
  %609 = vmatpush2.bf16.msra.mxu0 0
  %610 = vmatprep.subr.bf16.mxu0 0
  %611 = vmatpush2.bf16.msra.mxu0 0
  %612 = vmatprep.mubr.bf16.mxu0 0
  %613 = vmatmul.mubr.bf16.gmra.mxu0 %v578
  %v614 = vpop.f32.mrf.mxu0
  %v615 = vadd.f32 0.0, %v614
  %v616 = vpop.f32.mrf.mxu0
  %v617 = vpop.f32.mrf.mxu0
  %v618 = vadd.f32 0.0, %v617
  %v619 = vpop.f32.mrf.mxu0
  %620 = vdwg.mxu0
  %623 = vrot.lane.b32.xlu0 %v365, 8
  %v624 = vpop.permute.xlu0 %623
  %625 = vrot.lane.b32.xlu0 %v368, 8
  %v626 = vpop.permute.xlu0 %625
  %631 = vrot.lane.b32.xlu0 %v490, 16
  %v632 = vpop.permute.xlu0 %631
  %633 = vrot.lane.b32.xlu0 %v493, 16
  %v634 = vpop.permute.xlu0 %633
  %639 = vrot.lane.b32.xlu0 %v615, 24
  %v640 = vpop.permute.xlu0 %639
  %641 = vrot.lane.b32.xlu0 %v618, 24
  %v642 = vpop.permute.xlu0 %641
  %v645 = vsel %vm123, %v240, %v624
  %v646 = vsel %vm123, %v243, %v626
  %v647 = vsel %vm175, %v645, %v632
  %v648 = vsel %vm175, %v646, %v634
  %vm649 = vcmask 195584
  %v650 = vsel %vm649, %v647, %v640
  %v651 = vsel %vm649, %v648, %v642
  %v652 = vpack.c.bf16 %v651, %v650
  %v653 = vld [vmem:[%s5] sm:$0xf]
  %v654 = vld [vmem:[%s5 + $0x4] sm:$0xf]
  %v655 = vld [vmem:[%s5 + $0x8] sm:$0xf]
  %v656 = vld [vmem:[%s5 + $0xc] sm:$0xf]
  %v657 = vld [vmem:[%s6] sm:$0x1]
  %v659 = vlaneseq
  %v660 = vshrl.u32 %v659, 7
  %v661 = vsub.s32 0, %v660
  %v662 = vrot.slane %v657, %v661
  %v668 = vunpack.c.l.b16 %v653
  %v669 = vunpack.c.l.b16 %v654
  %v670 = vunpack.c.l.b16 %v655
  %v671 = vunpack.c.l.b16 %v656
  %v672 = vpack.c.b16 %v669, %v668
  %v673 = vpack.c.b16 %v671, %v670
  %v677 = vsel %vm59, %v652, 0
  %679 = vmatprep.subr.bf16.mxu0 0
  %680 = vmatpush1.bf16.msra.mxu0 0
  %681 = vmatprep.subr.bf16.mxu0 0
  %682 = vmatpush1.bf16.msra.mxu0 0
  %683 = vmatprep.subr.bf16.mxu0 0
  %684 = vmatpush1.bf16.msra.mxu0 0
  %685 = vmatprep.subr.bf16.mxu0 0
  %686 = vmatpush1.bf16.msra.mxu0 0
  %687 = vmatprep.subr.bf16.mxu0 0
  %688 = vmatpush1.bf16.msra.mxu0 0
  %689 = vmatprep.subr.bf16.mxu0 0
  %690 = vmatpush1.bf16.msra.mxu0 0
  %691 = vmatprep.subr.bf16.mxu0 0
  %692 = vmatpush1.bf16.msra.mxu0 %v673
  %693 = vmatprep.subr.bf16.mxu0 0
  %694 = vmatpush1.bf16.msra.mxu0 %v672
  %695 = vmatprep.subr.bf16.mxu0 0
  %696 = vmatpush2.bf16.msra.mxu0 0
  %697 = vmatprep.subr.bf16.mxu0 0
  %698 = vmatpush2.bf16.msra.mxu0 0
  %699 = vmatprep.subr.bf16.mxu0 0
  %700 = vmatpush2.bf16.msra.mxu0 0
  %701 = vmatprep.subr.bf16.mxu0 0
  %702 = vmatpush2.bf16.msra.mxu0 0
  %703 = vmatprep.subr.bf16.mxu0 0
  %704 = vmatpush2.bf16.msra.mxu0 0
  %705 = vmatprep.subr.bf16.mxu0 0
  %706 = vmatpush2.bf16.msra.mxu0 0
  %707 = vmatprep.subr.bf16.mxu0 0
  %708 = vmatpush2.bf16.msra.mxu0 0
  %709 = vmatprep.subr.bf16.mxu0 0
  %710 = vmatpush2.bf16.msra.mxu0 0
  %711 = vmatprep.mubr.bf16.mxu0 0
  %712 = vmatmul.mubr.bf16.gmra.mxu0 %v677
  %v713 = vpop.f32.mrf.mxu0
  %v714 = vadd.f32 %v662, %v713
  %v715 = vpop.f32.mrf.mxu0
  %v716 = vpop.f32.mrf.mxu0
  %v717 = vadd.f32 %v662, %v716
  %v718 = vpop.f32.mrf.mxu0
  %719 = vdwg.mxu0
  %v720 = vadd.f32 %v33, %v714
  %v721 = vadd.f32 %v34, %v717
  %v722 = vsel %vm59, %v720, 0.0
  %723 = vadd.xlane.f32.xlu0 %v722
  %v724 = vpop.xlane.xlu0 %723
  %v725 = vsel %vm59, %v721, 0.0
  %726 = vadd.xlane.f32.xlu0 %v725
  %v727 = vpop.xlane.xlu0 %726
  %v728 = vrcp.pop 32.0
  %v729 = vmul.f32 %v724, %v728
  %v730 = vmul.f32 %v727, %v728
  %v731 = vsub.f32 %v720, %v729
  %v732 = vsub.f32 %v721, %v730
  %v733 = vmul.f32 %v731, %v731
  %v734 = vmul.f32 %v732, %v732
  %v735 = vsel %vm59, %v733, 0.0
  %736 = vadd.xlane.f32.xlu0 %v735
  %v737 = vpop.xlane.xlu0 %736
  %v738 = vsel %vm59, %v734, 0.0
  %739 = vadd.xlane.f32.xlu0 %v738
  %v740 = vpop.xlane.xlu0 %739
  %v741 = vmul.f32 %v737, %v728
  %v742 = vmul.f32 %v740, %v728
  %v743 = vadd.f32 %v741, 1e-05
  %v744 = vadd.f32 %v742, 1e-05
  %v745 = vrsqrt.pop %v743
  %v746 = vrsqrt.pop %v744
  %v747 = vmul.f32 %v731, %v745
  %v748 = vmul.f32 %v732, %v746
  %v749 = vld [vmem:[%s7] sm:$0x1]
  %v751 = vlaneseq
  %v752 = vshrl.u32 %v751, 7
  %v753 = vsub.s32 0, %v752
  %v754 = vrot.slane %v749, %v753
  %v756 = vmul.f32 %v747, %v754
  %v757 = vmul.f32 %v748, %v754
  %v758 = vld [vmem:[%s8] sm:$0x1]
  %v760 = vlaneseq
  %v761 = vshrl.u32 %v760, 7
  %v762 = vsub.s32 0, %v761
  %v763 = vrot.slane %v758, %v762
  %v765 = vadd.f32 %v756, %v763
  %v766 = vadd.f32 %v757, %v763
  %767 = vst.msk [vmem:[%s9] sm:$0xff] %vm59, %v765
  %768 = vst.msk [vmem:[%s9 + $0x8] sm:$0xff] %vm59, %v766
  // Predicated region
  $region38: #{transformer_predictor_forward.7} parent=0 // pred_check
    _
  $region39: #{transformer_predictor_forward.7} parent=0 // pred_check_branch
    %770 = sbr.rel (0) target = $region41
  $region40: #{transformer_predictor_forward.7} parent=0 // pred_region
    _
  $region41: #{transformer_predictor_forward.7} parent=0 // pred_fallthru
    _
  // Predicated region
  $region42: #{transformer_predictor_forward.7} parent=0 // pred_check
    _
  $region43: #{transformer_predictor_forward.7} parent=0 // pred_check_branch
    %772 = sbr.rel (0) target = $region45
  $region44: #{transformer_predictor_forward.7} parent=0 // pred_region
    _
  $region45: #{transformer_predictor_forward.7} parent=0 // pred_fallthru
    _

// kernel: transformer_predictor_forward.8
$region0: #{transformer_predictor_forward.8}
  #allocation0 [shape = 'u32[]', space=smem, size = 0x4, offset = 0x4, fixed_abs, tag = 'smem constant byte address 0x4 - core index']
  #allocation1 [shape = 'u32[144,128]{1,0:T(1,128)}', space=vmem, size = 0x12000, scoped, tag = 'internal scratch']
  #allocation2 [shape = 'f32[16,32]{1,0:T(8,128)}', space=vmem, size = 0x2000, scoped, tag = 'scratch operand']
  %s0 = inlined_call_operand.vmem [shape: f32[16,32], index: 0, kind: input, shape index: {}]
  %s1 = inlined_call_operand.vmem [shape: bf16[32,2048], index: 1, kind: input, shape index: {}]
  %s2 = inlined_call_operand.vmem [shape: f32[1,2048], index: 2, kind: input, shape index: {}]
  %s3 = inlined_call_operand.vmem [shape: bf16[2048,32], index: 3, kind: input, shape index: {}]
  %s4 = inlined_call_operand.vmem [shape: f32[1,32], index: 4, kind: input, shape index: {}]
  %s5 = inlined_call_operand.vmem [shape: f32[1,32], index: 5, kind: input, shape index: {}]
  %s6 = inlined_call_operand.vmem [shape: f32[1,32], index: 6, kind: input, shape index: {}]
  %s7 = inlined_call_operand.vmem [shape: f32[16,32], index: 7, kind: output, shape index: {}]
  %s8 = sld [smem:[#allocation0]]
  $region92: #{transformer_predictor_forward.8} parent=0
    _
  %s10 = ssub.s32 1, %s8
  %s11 = scalar_select 0, %s10, %s8
  $region1: #{transformer_predictor_forward.8} parent=0
    #allocation3 [shape = 'u8[65536]{0}', space=vmem, size = 0x10000, scoped, tag = 'input window, operand 1']
    loop: start=0, step=1, limit=6
    $region2: #{transformer_predictor_forward.8} parent=1 // loop_pre_header
      _
    $region3: #{transformer_predictor_forward.8} parent=1 // loop_header
      %s13 = sphi 0, %s17
      %p14 = scmp.ge.s32.totalorder %s13, 6
      %s20 = sphi 0, %s32
      %s21 = sphi 0, %s28
      %s22 = sphi 0, %s20
      %s23 = sphi 0, %s21
      %s24 = sphi 0, %s22
      %s25 = sphi 0, %s23
      %s35 = sphi 0, %s37
      %s38 = sphi 0, %s35
      %s39 = sphi 0, %s38
      %s55 = sphi 0, %s39
      %s61 = sphi 0, %s63
      %s64 = sphi 0, %s61
      %s65 = sphi 0, %s64
      %s81 = sphi 0, %s65
      %s87 = sphi 0, %s89
      %s90 = sphi 0, %s87
      %s91 = sphi 0, %s90
      %s107 = sphi 0, %s91
      %s113 = sphi 0, %s115
      %s116 = sphi 0, %s113
      %s117 = sphi 0, %s116
      %s133 = sphi 0, %s117
      %s137 = sphi 0, %s137
      %s139 = sphi 0, %s137
      %s140 = sphi 0, %s139
      %s154 = sphi 0, %s140
      %s158 = sphi 0, %s158
      %s160 = sphi 0, %s158
      %s161 = sphi 0, %s160
      %s175 = sphi 0, %s161
      %s179 = sphi 0, %s179
      %s181 = sphi 0, %s179
      %s182 = sphi 0, %s181
      %s196 = sphi 0, %s182
      %s202 = sphi 0, %s204
      %s205 = sphi 0, %s202
      %s206 = sphi 0, %s205
      %s222 = sphi 0, %s206
    $region4: #{transformer_predictor_forward.8} parent=1 // loop_header_branch
      %16 = sbr.rel (%p14) target = $region8
    $region5: #{transformer_predictor_forward.8} parent=1 // loop_body
      %s18 = ssub.s32 %s13, 1
      %s19 = ssub.s32 %s13, 2
      %s26 = sadd.s32 1, %s21
      %p27 = scmp.ge.s32.totalorder %s26, 4
      %s28 = scalar_select %p27, 0, %s26
      %s29 = sadd.s32 1, %s20
      %s30 = scalar_select %p27, %s29, %s20
      %p31 = scmp.ge.s32.totalorder %s30, 1
      %s32 = scalar_select %p31, 0, %s30
      %s33 = ssub.s32 %s20, %s32
      %p34 = scmp.eq.s32.totalorder %s33, 0
      %s36 = sadd.s32 %s35, 1
      %s37 = scalar_select %p34, %s35, %s36
      %p40 = pneg %p34
      %p41 = scmp.eq.s32.totalorder %s13, 3
      %p42 = por %p40, %p41
      %p43 = scmp.ne.s32.totalorder %s35, %s38
      %p44 = scmp.eq.s32.totalorder %s13, 0
      %p45 = por %p43, %p44
      %p46 = scmp.ne.s32.totalorder %s35, %s38
      %p47 = scmp.eq.s32.totalorder %s18, 3
      %p48 = por %p46, %p47
      %p49 = scmp.ne.s32.totalorder %s38, %s39
      %p50 = scmp.eq.s32.totalorder %s18, 0
      %p51 = por %p49, %p50
      %p52 = scmp.ne.s32.totalorder %s38, %s39
      %p53 = scmp.eq.s32.totalorder %s19, 3
      %p54 = por %p52, %p53
      %p56 = scmp.ne.s32.totalorder %s39, %s55
      %p57 = scmp.eq.s32.totalorder %s19, 0
      %p58 = por %p56, %p57
      %s59 = ssub.s32 %s21, %s28
      %p60 = scmp.eq.s32.totalorder %s59, 0
      %s62 = sadd.s32 %s61, 1
      %s63 = scalar_select %p60, %s61, %s62
      %p66 = pneg %p60
      %p67 = scmp.eq.s32.totalorder %s13, 3
      %p68 = por %p66, %p67
      %p69 = scmp.ne.s32.totalorder %s61, %s64
      %p70 = scmp.eq.s32.totalorder %s13, 0
      %p71 = por %p69, %p70
      %p72 = scmp.ne.s32.totalorder %s61, %s64
      %p73 = scmp.eq.s32.totalorder %s18, 3
      %p74 = por %p72, %p73
      %p75 = scmp.ne.s32.totalorder %s64, %s65
      %p76 = scmp.eq.s32.totalorder %s18, 0
      %p77 = por %p75, %p76
      %p78 = scmp.ne.s32.totalorder %s64, %s65
      %p79 = scmp.eq.s32.totalorder %s19, 3
      %p80 = por %p78, %p79
      %p82 = scmp.ne.s32.totalorder %s65, %s81
      %p83 = scmp.eq.s32.totalorder %s19, 0
      %p84 = por %p82, %p83
      %s85 = ssub.s32 %s21, %s28
      %p86 = scmp.eq.s32.totalorder %s85, 0
      %s88 = sadd.s32 %s87, 1
      %s89 = scalar_select %p86, %s87, %s88
      %p92 = pneg %p86
      %p93 = scmp.eq.s32.totalorder %s13, 3
      %p94 = por %p92, %p93
      %p95 = scmp.ne.s32.totalorder %s87, %s90
      %p96 = scmp.eq.s32.totalorder %s13, 0
      %p97 = por %p95, %p96
      %p98 = scmp.ne.s32.totalorder %s87, %s90
      %p99 = scmp.eq.s32.totalorder %s18, 3
      %p100 = por %p98, %p99
      %p101 = scmp.ne.s32.totalorder %s90, %s91
      %p102 = scmp.eq.s32.totalorder %s18, 0
      %p103 = por %p101, %p102
      %p104 = scmp.ne.s32.totalorder %s90, %s91
      %p105 = scmp.eq.s32.totalorder %s19, 3
      %p106 = por %p104, %p105
      %p108 = scmp.ne.s32.totalorder %s91, %s107
      %p109 = scmp.eq.s32.totalorder %s19, 0
      %p110 = por %p108, %p109
      %s111 = ssub.s32 %s21, %s28
      %p112 = scmp.eq.s32.totalorder %s111, 0
      %s114 = sadd.s32 %s113, 1
      %s115 = scalar_select %p112, %s113, %s114
      %p118 = pneg %p112
      %p119 = scmp.eq.s32.totalorder %s13, 3
      %p120 = por %p118, %p119
      %p121 = scmp.ne.s32.totalorder %s113, %s116
      %p122 = scmp.eq.s32.totalorder %s13, 0
      %p123 = por %p121, %p122
      %p124 = scmp.ne.s32.totalorder %s113, %s116
      %p125 = scmp.eq.s32.totalorder %s18, 3
      %p126 = por %p124, %p125
      %p127 = scmp.ne.s32.totalorder %s116, %s117
      %p128 = scmp.eq.s32.totalorder %s18, 0
      %p129 = por %p127, %p128
      %p130 = scmp.ne.s32.totalorder %s116, %s117
      %p131 = scmp.eq.s32.totalorder %s19, 3
      %p132 = por %p130, %p131
      %p134 = scmp.ne.s32.totalorder %s117, %s133
      %p135 = scmp.eq.s32.totalorder %s19, 0
      %p136 = por %p134, %p135
      %s138 = sadd.s32 %s137, 1
      %p141 = scmp.eq.s32.totalorder %s13, 3
      %p142 = scmp.ne.s32.totalorder %s137, %s139
      %p143 = scmp.eq.s32.totalorder %s13, 0
      %p144 = por %p142, %p143
      %p145 = scmp.ne.s32.totalorder %s137, %s139
      %p146 = scmp.eq.s32.totalorder %s18, 3
      %p147 = por %p145, %p146
      %p148 = scmp.ne.s32.totalorder %s139, %s140
      %p149 = scmp.eq.s32.totalorder %s18, 0
      %p150 = por %p148, %p149
      %p151 = scmp.ne.s32.totalorder %s139, %s140
      %p152 = scmp.eq.s32.totalorder %s19, 3
      %p153 = por %p151, %p152
      %p155 = scmp.ne.s32.totalorder %s140, %s154
      %p156 = scmp.eq.s32.totalorder %s19, 0
      %p157 = por %p155, %p156
      %s159 = sadd.s32 %s158, 1
      %p162 = scmp.eq.s32.totalorder %s13, 3
      %p163 = scmp.ne.s32.totalorder %s158, %s160
      %p164 = scmp.eq.s32.totalorder %s13, 0
      %p165 = por %p163, %p164
      %p166 = scmp.ne.s32.totalorder %s158, %s160
      %p167 = scmp.eq.s32.totalorder %s18, 3
      %p168 = por %p166, %p167
      %p169 = scmp.ne.s32.totalorder %s160, %s161
      %p170 = scmp.eq.s32.totalorder %s18, 0
      %p171 = por %p169, %p170
      %p172 = scmp.ne.s32.totalorder %s160, %s161
      %p173 = scmp.eq.s32.totalorder %s19, 3
      %p174 = por %p172, %p173
      %p176 = scmp.ne.s32.totalorder %s161, %s175
      %p177 = scmp.eq.s32.totalorder %s19, 0
      %p178 = por %p176, %p177
      %s180 = sadd.s32 %s179, 1
      %p183 = scmp.eq.s32.totalorder %s13, 3
      %p184 = scmp.ne.s32.totalorder %s179, %s181
      %p185 = scmp.eq.s32.totalorder %s13, 0
      %p186 = por %p184, %p185
      %p187 = scmp.ne.s32.totalorder %s179, %s181
      %p188 = scmp.eq.s32.totalorder %s18, 3
      %p189 = por %p187, %p188
      %p190 = scmp.ne.s32.totalorder %s181, %s182
      %p191 = scmp.eq.s32.totalorder %s18, 0
      %p192 = por %p190, %p191
      %p193 = scmp.ne.s32.totalorder %s181, %s182
      %p194 = scmp.eq.s32.totalorder %s19, 3
      %p195 = por %p193, %p194
      %p197 = scmp.ne.s32.totalorder %s182, %s196
      %p198 = scmp.eq.s32.totalorder %s19, 0
      %p199 = por %p197, %p198
      %s200 = ssub.s32 %s20, %s32
      %p201 = scmp.eq.s32.totalorder %s200, 0
      %s203 = sadd.s32 %s202, 1
      %s204 = scalar_select %p201, %s202, %s203
      %p207 = pneg %p201
      %p208 = scmp.eq.s32.totalorder %s13, 3
      %p209 = por %p207, %p208
      %p210 = scmp.ne.s32.totalorder %s202, %s205
      %p211 = scmp.eq.s32.totalorder %s13, 0
      %p212 = por %p210, %p211
      %p213 = scmp.ne.s32.totalorder %s202, %s205
      %p214 = scmp.eq.s32.totalorder %s18, 3
      %p215 = por %p213, %p214
      %p216 = scmp.ne.s32.totalorder %s205, %s206
      %p217 = scmp.eq.s32.totalorder %s18, 0
      %p218 = por %p216, %p217
      %p219 = scmp.ne.s32.totalorder %s205, %s206
      %p220 = scmp.eq.s32.totalorder %s19, 3
      %p221 = por %p219, %p220
      %p223 = scmp.ne.s32.totalorder %s206, %s222
      %p224 = scmp.eq.s32.totalorder %s19, 0
      %p225 = por %p223, %p224
      %p226 = scmp.le.s32.totalorder 1, %s13
      %p227 = scmp.lt.s32.totalorder %s13, 5
      %p228 = pnand %p226, %p227
      %p229 = pneg %p228
      // Predicated region
      $region9: #{transformer_predictor_forward.8} parent=5 // pred_check
        _
      $region10: #{transformer_predictor_forward.8} parent=5 // pred_check_branch
        %231 = sbr.rel (%p228) target = $region12
      $region11: #{transformer_predictor_forward.8} parent=5 // pred_region
        %s232 = ssub.s32 %s13, 1
        // Predicated region
        $region13: #{transformer_predictor_forward.8} parent=11 // pred_check
          %p233 = pneg %p51
        $region14: #{transformer_predictor_forward.8} parent=11 // pred_check_branch
          %235 = sbr.rel (%p233) target = $region16
        $region15: #{transformer_predictor_forward.8} parent=11 // pred_region
          %s236 = smul.u32 2, %s22
          %p237 = scmp.lt.s32.totalorder %s236, 1
          %s238 = scalar_select %p237, %s236, 1
          %s239 = smul.addr %s238, 8
          %s240 = scalar_lea.vmem %s0, %s239
          %s241 = smul.u32 2, %s22
        $region16: #{transformer_predictor_forward.8} parent=11 // pred_fallthru
          _
        // Predicated region
        $region17: #{transformer_predictor_forward.8} parent=11 // pred_check
          %p242 = pneg %p150
        $region18: #{transformer_predictor_forward.8} parent=11 // pred_check_branch
          %244 = sbr.rel (%p242) target = $region20
        $region19: #{transformer_predictor_forward.8} parent=11 // pred_region
          _
        $region20: #{transformer_predictor_forward.8} parent=11 // pred_fallthru
          _
        // Predicated region
        $region21: #{transformer_predictor_forward.8} parent=11 // pred_check
          %p245 = pneg %p171
        $region22: #{transformer_predictor_forward.8} parent=11 // pred_check_branch
          %247 = sbr.rel (%p245) target = $region24
        $region23: #{transformer_predictor_forward.8} parent=11 // pred_region
          _
        $region24: #{transformer_predictor_forward.8} parent=11 // pred_fallthru
          _
        // Predicated region
        $region25: #{transformer_predictor_forward.8} parent=11 // pred_check
          %p248 = pneg %p192
        $region26: #{transformer_predictor_forward.8} parent=11 // pred_check_branch
          %250 = sbr.rel (%p248) target = $region28
        $region27: #{transformer_predictor_forward.8} parent=11 // pred_region
          _
        $region28: #{transformer_predictor_forward.8} parent=11 // pred_fallthru
          _
      $region12: #{transformer_predictor_forward.8} parent=5 // pred_fallthru
        _
      %p251 = scmp.lt.s32.totalorder %s13, 4
      // Predicated region
      $region29: #{transformer_predictor_forward.8} parent=5 // pred_check
        %p252 = pneg %p251
      $region30: #{transformer_predictor_forward.8} parent=5 // pred_check_branch
        %254 = sbr.rel (%p252) target = $region32
      $region31: #{transformer_predictor_forward.8} parent=5 // pred_region
        // Predicated region
        $region33: #{transformer_predictor_forward.8} parent=31 // pred_check
          %p255 = pneg %p71
        $region34: #{transformer_predictor_forward.8} parent=31 // pred_check_branch
          %257 = sbr.rel (%p255) target = $region36
        $region35: #{transformer_predictor_forward.8} parent=31 // pred_region
          %s258 = sand.u32 %s61, 1
          %s259 = sand.u32 %s61, 1
          %s260 = smul.addr %s259, 64
          %s261 = scalar_lea.vmem [#allocation3], %s260
          %s262 = smul.u32 4, %s21
          %s263 = smul.addr %s262, 4
          %s264 = scalar_lea.vmem %s1, %s263
          // Predicated region
          $region37: #{transformer_predictor_forward.8} parent=35 // pred_check
            _
          $region38: #{transformer_predictor_forward.8} parent=35 // pred_check_branch
            %266 = sbr.rel (0) target = $region40
          $region39: #{transformer_predictor_forward.8} parent=35 // pred_region
            // Predicated region
            $region41: #{transformer_predictor_forward.8} parent=39 // pred_check
              _
            $region42: #{transformer_predictor_forward.8} parent=39 // pred_check_branch
              %268 = sbr.rel (0) target = $region44
            $region43: #{transformer_predictor_forward.8} parent=39 // pred_region
              loop: start=0, step=1, limit=1
              $region45: #{transformer_predictor_forward.8} parent=43 // loop_pre_header
                _
              $region46: #{transformer_predictor_forward.8} parent=43 // loop_header
                %s270 = sphi 0, %s274
                %p271 = scmp.ge.s32.totalorder %s270, 1
                %s275 = sphi %s264, %s264
                %s276 = sphi %s261, %s261
              $region47: #{transformer_predictor_forward.8} parent=43 // loop_header_branch
                %273 = sbr.rel (%p271) target = $region51
              $region48: #{transformer_predictor_forward.8} parent=43 // loop_body
                %v277 = vld [vmem:[%s275] sm:$0xff]
                %278 = vst [vmem:[%s276] sm:$0xff] %v277
                %v279 = vld [vmem:[%s275 + $0x8] sm:$0xff]
                %280 = vst [vmem:[%s276 + $0x8] sm:$0xff] %v279
                %v281 = vld [vmem:[%s275 + $0x40] sm:$0xff]
                %282 = vst [vmem:[%s276 + $0x10] sm:$0xff] %v281
                %v283 = vld [vmem:[%s275 + $0x48] sm:$0xff]
                %284 = vst [vmem:[%s276 + $0x18] sm:$0xff] %v283
                %v285 = vld [vmem:[%s275 + $0x80] sm:$0xff]
                %286 = vst [vmem:[%s276 + $0x20] sm:$0xff] %v285
                %v287 = vld [vmem:[%s275 + $0x88] sm:$0xff]
                %288 = vst [vmem:[%s276 + $0x28] sm:$0xff] %v287
                %v289 = vld [vmem:[%s275 + $0xc0] sm:$0xff]
                %290 = vst [vmem:[%s276 + $0x30] sm:$0xff] %v289
                %v291 = vld [vmem:[%s275 + $0xc8] sm:$0xff]
                %292 = vst [vmem:[%s276 + $0x38] sm:$0xff] %v291
              $region49: #{transformer_predictor_forward.8} parent=43 // loop_footer
                %s274 = sadd.s32 1, %s270
              $region50: #{transformer_predictor_forward.8} parent=43 // loop_footer_branch
                %269 = sbr.rel target = $region46
              $region51: #{transformer_predictor_forward.8} parent=43 // loop_exit
                _
            $region44: #{transformer_predictor_forward.8} parent=39 // pred_fallthru
              _
            // Predicated region
            $region52: #{transformer_predictor_forward.8} parent=39 // pred_check
              _
            $region53: #{transformer_predictor_forward.8} parent=39 // pred_check_branch
              %294 = sbr.rel target = $region55
            $region54: #{transformer_predictor_forward.8} parent=39 // pred_region
              _
            $region55: #{transformer_predictor_forward.8} parent=39 // pred_fallthru
              _
          $region40: #{transformer_predictor_forward.8} parent=35 // pred_fallthru
            _
          %295 = vnop
        $region36: #{transformer_predictor_forward.8} parent=31 // pred_fallthru
          _
        // Predicated region
        $region56: #{transformer_predictor_forward.8} parent=31 // pred_check
          %p296 = pneg %p97
        $region57: #{transformer_predictor_forward.8} parent=31 // pred_check_branch
          %298 = sbr.rel (%p296) target = $region59
        $region58: #{transformer_predictor_forward.8} parent=31 // pred_region
          %s299 = smul.u32 4, %s21
          %p300 = scmp.lt.s32.totalorder %s299, 15
          %s301 = scalar_select %p300, %s299, 15
          %s302 = scalar_lea.vmem %s2, %s301
          %s303 = smul.u32 4, %s21
        $region59: #{transformer_predictor_forward.8} parent=31 // pred_fallthru
          _
        // Predicated region
        $region60: #{transformer_predictor_forward.8} parent=31 // pred_check
          %p304 = pneg %p123
        $region61: #{transformer_predictor_forward.8} parent=31 // pred_check_branch
          %306 = sbr.rel (%p304) target = $region63
        $region62: #{transformer_predictor_forward.8} parent=31 // pred_region
          %s307 = smul.u32 64, %s21
          %p308 = scmp.lt.s32.totalorder %s307, 255
          %s309 = scalar_select %p308, %s307, 255
          %s310 = smul.addr %s309, 4
          %s311 = scalar_lea.vmem %s3, %s310
          %s312 = smul.u32 64, %s21
        $region63: #{transformer_predictor_forward.8} parent=31 // pred_fallthru
          _
      $region32: #{transformer_predictor_forward.8} parent=5 // pred_fallthru
        _
      %p313 = scmp.le.s32.totalorder 1, %s13
      %p314 = scmp.lt.s32.totalorder %s13, 5
      %p315 = pnand %p313, %p314
      %p316 = pneg %p315
      // Predicated region
      $region64: #{transformer_predictor_forward.8} parent=5 // pred_check
        _
      $region65: #{transformer_predictor_forward.8} parent=5 // pred_check_branch
        %318 = sbr.rel (%p315) target = $region67
      $region66: #{transformer_predictor_forward.8} parent=5 // pred_region
        %s319 = ssub.s32 %s13, 1
        %s320 = sand.u32 %s64, 1
        %s321 = sand.u32 %s64, 1
        %s322 = smul.addr %s321, 64
        %s323 = scalar_lea.vmem [#allocation3], %s322
        // Predicated region
        $region68: #{transformer_predictor_forward.8} parent=66 // pred_check
          %p324 = pneg %p77
        $region69: #{transformer_predictor_forward.8} parent=66 // pred_check_branch
          %326 = sbr.rel (%p324) target = $region71
        $region70: #{transformer_predictor_forward.8} parent=66 // pred_region
          _
        $region71: #{transformer_predictor_forward.8} parent=66 // pred_fallthru
          _
        %s327 = smul.u32 2, %s22
        %p328 = scmp.lt.s32.totalorder %s327, 1
        %s329 = scalar_select %p328, %s327, 1
        %s330 = smul.addr %s329, 8
        %s331 = scalar_lea.vmem %s0, %s330
        %p332 = pneg %p51
        %p333 = pneg %p48
        %s334 = sand.u32 %s64, 1
        %s335 = sand.u32 %s64, 1
        %s336 = smul.addr %s335, 64
        %s337 = scalar_lea.vmem [#allocation3], %s336
        %p338 = pneg %p77
        %p339 = pneg %p74
        %s340 = smul.u32 4, %s23
        %p341 = scmp.lt.s32.totalorder %s340, 15
        %s342 = scalar_select %p341, %s340, 15
        %s343 = scalar_lea.vmem %s2, %s342
        %p344 = pneg %p103
        %p345 = pneg %p100
        %s346 = smul.u32 64, %s23
        %p347 = scmp.lt.s32.totalorder %s346, 255
        %s348 = scalar_select %p347, %s346, 255
        %s349 = smul.addr %s348, 4
        %s350 = scalar_lea.vmem %s3, %s349
        %p351 = pneg %p129
        %p352 = pneg %p126
        %p353 = pneg %p150
        %p354 = pneg %p147
        %p355 = pneg %p171
        %p356 = pneg %p168
        %p357 = pneg %p192
        %p358 = pneg %p189
        %p359 = pneg %p218
        %p360 = pneg %p215
        %s361 = smul.u32 2, %s22
        %p362 = scmp.lt.s32.totalorder %s361, 1
        %s363 = scalar_select %p362, %s361, 1
        %s364 = smul.addr %s363, 8
        %s365 = scalar_lea.vmem %s7, %s364
        %s366 = smul.u32 2, %s22
        %p367 = scmp.lt.s32.totalorder %s366, 1
        %s368 = scalar_select %p367, %s366, 1
        %s369 = smul.addr %s368, 8
        %s370 = scalar_lea.vmem %s0, %s369
        %s371 = smul.u32 2, %s22
        %s372 = smul.u32 4, %s23
        %s373 = smul.u32 4, %s23
        %p374 = scmp.lt.s32.totalorder %s373, 15
        %s375 = scalar_select %p374, %s373, 15
        %s376 = scalar_lea.vmem %s2, %s375
        %s377 = smul.u32 4, %s23
        %s378 = smul.u32 64, %s23
        %p379 = scmp.lt.s32.totalorder %s378, 255
        %s380 = scalar_select %p379, %s378, 255
        %s381 = smul.addr %s380, 4
        %s382 = scalar_lea.vmem %s3, %s381
        %s383 = smul.u32 64, %s23
        %s384 = smul.u32 2, %s22
        %p385 = scmp.lt.s32.totalorder %s384, 1
        %s386 = scalar_select %p385, %s384, 1
        %s387 = smul.addr %s386, 8
        %s388 = scalar_lea.vmem %s7, %s387
        %s389 = smul.u32 2, %s22
        %p391 = scmp.eq.s32.totalorder %s23, 0
        // Predicated region
        $region72: #{transformer_predictor_forward.8} parent=66 // pred_check
          %p392 = pneg %p391
        $region73: #{transformer_predictor_forward.8} parent=66 // pred_check_branch
          %394 = sbr.rel (%p392) target = $region75
        $region74: #{transformer_predictor_forward.8} parent=66 // pred_region
          %vm395 = vcmask 261120
          %396 = vst.msk [vmem:[#allocation2] sm:$0xff] %vm395, 0.0
          %397 = vst.msk [vmem:[#allocation2 + $0x8] sm:$0xff] %vm395, 0.0
        $region75: #{transformer_predictor_forward.8} parent=66 // pred_fallthru
          _
        %v398 = vld [vmem:[%s370] sm:$0xff]
        %v399 = vld [vmem:[%s370 + $0x8] sm:$0xff]
        %v400 = vpack.c.bf16 %v399, %v398
        %v401 = vld [vmem:[%s323] sm:$0xff]
        %v402 = vld [vmem:[%s323 + $0x8] sm:$0xff]
        %v403 = vld [vmem:[%s323 + $0x10] sm:$0xff]
        %v404 = vld [vmem:[%s323 + $0x18] sm:$0xff]
        %v405 = vld [vmem:[%s323 + $0x20] sm:$0xff]
        %v406 = vld [vmem:[%s323 + $0x28] sm:$0xff]
        %v407 = vld [vmem:[%s323 + $0x30] sm:$0xff]
        %v408 = vld [vmem:[%s323 + $0x38] sm:$0xff]
        %v409 = vld [vmem:[%s376] sm:$0xf]
        %v411 = vlaneseq
        %v412 = vshrl.u32 %v411, 7
        %v413 = vsub.s32 0, %v412
        %v414 = vrot.slane %v409, %v413
        %v415 = vlaneseq
        %v416 = vshrl.u32 %v415, 7
        %v417 = vsub.s32 1, %v416
        %v418 = vrot.slane %v409, %v417
        %v419 = vlaneseq
        %v420 = vshrl.u32 %v419, 7
        %v421 = vsub.s32 2, %v420
        %v422 = vrot.slane %v409, %v421
        %v423 = vlaneseq
        %v424 = vshrl.u32 %v423, 7
        %v425 = vsub.s32 3, %v424
        %v426 = vrot.slane %v409, %v425
        %v439 = vunpack.c.l.b16 %v401
        %v440 = vunpack.c.h.b16 %v401
        %v441 = vunpack.c.l.b16 %v402
        %v442 = vunpack.c.h.b16 %v402
        %v443 = vunpack.c.l.b16 %v403
        %v444 = vunpack.c.h.b16 %v403
        %v445 = vunpack.c.l.b16 %v404
        %v446 = vunpack.c.h.b16 %v404
        %v447 = vunpack.c.l.b16 %v405
        %v448 = vunpack.c.h.b16 %v405
        %v449 = vunpack.c.l.b16 %v406
        %v450 = vunpack.c.h.b16 %v406
        %v451 = vunpack.c.l.b16 %v407
        %v452 = vunpack.c.h.b16 %v407
        %v453 = vunpack.c.l.b16 %v408
        %v454 = vunpack.c.h.b16 %v408
        %v455 = vpack.c.b16 %v443, %v439
        %v456 = vpack.c.b16 %v444, %v440
        %v457 = vpack.c.b16 %v445, %v441
        %v458 = vpack.c.b16 %v446, %v442
        %v459 = vpack.c.b16 %v451, %v447
        %v460 = vpack.c.b16 %v452, %v448
        %v461 = vpack.c.b16 %v453, %v449
        %v462 = vpack.c.b16 %v454, %v450
        %vm471 = vcmask 261120
        %v473 = vsel %vm471, %v400, 0
        %475 = vmatprep.subr.bf16.mxu0 0
        %476 = vmatpush1.bf16.msra.mxu0 0
        %477 = vmatprep.subr.bf16.mxu0 0
        %478 = vmatpush1.bf16.msra.mxu0 0
        %479 = vmatprep.subr.bf16.mxu0 0
        %480 = vmatpush1.bf16.msra.mxu0 0
        %481 = vmatprep.subr.bf16.mxu0 0
        %482 = vmatpush1.bf16.msra.mxu0 0
        %483 = vmatprep.subr.bf16.mxu0 0
        %484 = vmatpush1.bf16.msra.mxu0 0
        %485 = vmatprep.subr.bf16.mxu0 0
        %486 = vmatpush1.bf16.msra.mxu0 0
        %487 = vmatprep.subr.bf16.mxu0 %v460
        %488 = vmatpush1.bf16.msra.mxu0 %v459
        %489 = vmatprep.subr.bf16.mxu0 %v456
        %490 = vmatpush1.bf16.msra.mxu0 %v455
        %491 = vmatprep.subr.bf16.mxu0 0
        %492 = vmatpush2.bf16.msra.mxu0 0
        %493 = vmatprep.subr.bf16.mxu0 0
        %494 = vmatpush2.bf16.msra.mxu0 0
        %495 = vmatprep.subr.bf16.mxu0 0
        %496 = vmatpush2.bf16.msra.mxu0 0
        %497 = vmatprep.subr.bf16.mxu0 0
        %498 = vmatpush2.bf16.msra.mxu0 0
        %499 = vmatprep.subr.bf16.mxu0 0
        %500 = vmatpush2.bf16.msra.mxu0 0
        %501 = vmatprep.subr.bf16.mxu0 0
        %502 = vmatpush2.bf16.msra.mxu0 0
        %503 = vmatprep.subr.bf16.mxu0 0
        %504 = vmatpush2.bf16.msra.mxu0 0
        %505 = vmatprep.subr.bf16.mxu0 0
        %506 = vmatpush2.bf16.msra.mxu0 0
        %507 = vmatprep.mubr.bf16.mxu0 0
        %508 = vmatmul.mubr.bf16.gmra.mxu0 %v473
        %v509 = vpop.f32.mrf.mxu0
        %v510 = vadd.f32 %v414, %v509
        %v511 = vpop.f32.mrf.mxu0
        %v512 = vadd.f32 %v418, %v511
        %v513 = vpop.f32.mrf.mxu0
        %v514 = vadd.f32 %v414, %v513
        %v515 = vpop.f32.mrf.mxu0
        %v516 = vadd.f32 %v418, %v515
        %517 = vdwg.mxu0
        %518 = vmatprep.subr.bf16.mxu0 0
        %519 = vmatpush1.bf16.msra.mxu0 0
        %520 = vmatprep.subr.bf16.mxu0 0
        %521 = vmatpush1.bf16.msra.mxu0 0
        %522 = vmatprep.subr.bf16.mxu0 0
        %523 = vmatpush1.bf16.msra.mxu0 0
        %524 = vmatprep.subr.bf16.mxu0 0
        %525 = vmatpush1.bf16.msra.mxu0 0
        %526 = vmatprep.subr.bf16.mxu0 0
        %527 = vmatpush1.bf16.msra.mxu0 0
        %528 = vmatprep.subr.bf16.mxu0 0
        %529 = vmatpush1.bf16.msra.mxu0 0
        %530 = vmatprep.subr.bf16.mxu0 %v462
        %531 = vmatpush1.bf16.msra.mxu0 %v461
        %532 = vmatprep.subr.bf16.mxu0 %v458
        %533 = vmatpush1.bf16.msra.mxu0 %v457
        %534 = vmatprep.subr.bf16.mxu0 0
        %535 = vmatpush2.bf16.msra.mxu0 0
        %536 = vmatprep.subr.bf16.mxu0 0
        %537 = vmatpush2.bf16.msra.mxu0 0
        %538 = vmatprep.subr.bf16.mxu0 0
        %539 = vmatpush2.bf16.msra.mxu0 0
        %540 = vmatprep.subr.bf16.mxu0 0
        %541 = vmatpush2.bf16.msra.mxu0 0
        %542 = vmatprep.subr.bf16.mxu0 0
        %543 = vmatpush2.bf16.msra.mxu0 0
        %544 = vmatprep.subr.bf16.mxu0 0
        %545 = vmatpush2.bf16.msra.mxu0 0
        %546 = vmatprep.subr.bf16.mxu0 0
        %547 = vmatpush2.bf16.msra.mxu0 0
        %548 = vmatprep.subr.bf16.mxu0 0
        %549 = vmatpush2.bf16.msra.mxu0 0
        %550 = vmatprep.mubr.bf16.mxu0 0
        %551 = vmatmul.mubr.bf16.gmra.mxu0 %v473
        %v552 = vpop.f32.mrf.mxu0
        %v553 = vadd.f32 %v422, %v552
        %v554 = vpop.f32.mrf.mxu0
        %v555 = vadd.f32 %v426, %v554
        %v556 = vpop.f32.mrf.mxu0
        %v557 = vadd.f32 %v422, %v556
        %v558 = vpop.f32.mrf.mxu0
        %v559 = vadd.f32 %v426, %v558
        %560 = vdwg.mxu0
        %v561 = vmax.f32 %v510, 0.0
        %v562 = vmax.f32 %v512, 0.0
        %v563 = vmax.f32 %v553, 0.0
        %v564 = vmax.f32 %v555, 0.0
        %v565 = vmax.f32 %v514, 0.0
        %v566 = vmax.f32 %v516, 0.0
        %v567 = vmax.f32 %v557, 0.0
        %v568 = vmax.f32 %v559, 0.0
        %v569 = vld [vmem:[#allocation2] sm:$0xff]
        %v570 = vld [vmem:[#allocation2 + $0x8] sm:$0xff]
        %v571 = vpack.c.bf16 %v565, %v561
        %v572 = vpack.c.bf16 %v566, %v562
        %v573 = vpack.c.bf16 %v567, %v563
        %v574 = vpack.c.bf16 %v568, %v564
        %v575 = vld [vmem:[%s382] sm:$0xf]
        %v576 = vld [vmem:[%s382 + $0x4] sm:$0xf]
        %v577 = vld [vmem:[%s382 + $0x8] sm:$0xf]
        %v578 = vld [vmem:[%s382 + $0xc] sm:$0xf]
        %v579 = vld [vmem:[%s382 + $0x10] sm:$0xf]
        %v580 = vld [vmem:[%s382 + $0x14] sm:$0xf]
        %v581 = vld [vmem:[%s382 + $0x18] sm:$0xf]
        %v582 = vld [vmem:[%s382 + $0x1c] sm:$0xf]
        %v583 = vld [vmem:[%s382 + $0x20] sm:$0xf]
        %v584 = vld [vmem:[%s382 + $0x24] sm:$0xf]
        %v585 = vld [vmem:[%s382 + $0x28] sm:$0xf]
        %v586 = vld [vmem:[%s382 + $0x2c] sm:$0xf]
        %v587 = vld [vmem:[%s382 + $0x30] sm:$0xf]
        %v588 = vld [vmem:[%s382 + $0x34] sm:$0xf]
        %v589 = vld [vmem:[%s382 + $0x38] sm:$0xf]
        %v590 = vld [vmem:[%s382 + $0x3c] sm:$0xf]
        %v591 = vld [vmem:[%s382 + $0x40] sm:$0xf]
        %v592 = vld [vmem:[%s382 + $0x44] sm:$0xf]
        %v593 = vld [vmem:[%s382 + $0x48] sm:$0xf]
        %v594 = vld [vmem:[%s382 + $0x4c] sm:$0xf]
        %v595 = vld [vmem:[%s382 + $0x50] sm:$0xf]
        %v596 = vld [vmem:[%s382 + $0x54] sm:$0xf]
        %v597 = vld [vmem:[%s382 + $0x58] sm:$0xf]
        %v598 = vld [vmem:[%s382 + $0x5c] sm:$0xf]
        %v599 = vld [vmem:[%s382 + $0x60] sm:$0xf]
        %v600 = vld [vmem:[%s382 + $0x64] sm:$0xf]
        %v601 = vld [vmem:[%s382 + $0x68] sm:$0xf]
        %v602 = vld [vmem:[%s382 + $0x6c] sm:$0xf]
        %v603 = vld [vmem:[%s382 + $0x70] sm:$0xf]
        %v604 = vld [vmem:[%s382 + $0x74] sm:$0xf]
        %v605 = vld [vmem:[%s382 + $0x78] sm:$0xf]
        %v606 = vld [vmem:[%s382 + $0x7c] sm:$0xf]
        %v607 = vld [vmem:[%s382 + $0x80] sm:$0xf]
        %v608 = vld [vmem:[%s382 + $0x84] sm:$0xf]
        %v609 = vld [vmem:[%s382 + $0x88] sm:$0xf]
        %v610 = vld [vmem:[%s382 + $0x8c] sm:$0xf]
        %v611 = vld [vmem:[%s382 + $0x90] sm:$0xf]
        %v612 = vld [vmem:[%s382 + $0x94] sm:$0xf]
        %v613 = vld [vmem:[%s382 + $0x98] sm:$0xf]
        %v614 = vld [vmem:[%s382 + $0x9c] sm:$0xf]
        %v615 = vld [vmem:[%s382 + $0xa0] sm:$0xf]
        %v616 = vld [vmem:[%s382 + $0xa4] sm:$0xf]
        %v617 = vld [vmem:[%s382 + $0xa8] sm:$0xf]
        %v618 = vld [vmem:[%s382 + $0xac] sm:$0xf]
        %v619 = vld [vmem:[%s382 + $0xb0] sm:$0xf]
        %v620 = vld [vmem:[%s382 + $0xb4] sm:$0xf]
        %v621 = vld [vmem:[%s382 + $0xb8] sm:$0xf]
        %v622 = vld [vmem:[%s382 + $0xbc] sm:$0xf]
        %v623 = vld [vmem:[%s382 + $0xc0] sm:$0xf]
        %v624 = vld [vmem:[%s382 + $0xc4] sm:$0xf]
        %v625 = vld [vmem:[%s382 + $0xc8] sm:$0xf]
        %v626 = vld [vmem:[%s382 + $0xcc] sm:$0xf]
        %v627 = vld [vmem:[%s382 + $0xd0] sm:$0xf]
        %v628 = vld [vmem:[%s382 + $0xd4] sm:$0xf]
        %v629 = vld [vmem:[%s382 + $0xd8] sm:$0xf]
        %v630 = vld [vmem:[%s382 + $0xdc] sm:$0xf]
        %v631 = vld [vmem:[%s382 + $0xe0] sm:$0xf]
        %v632 = vld [vmem:[%s382 + $0xe4] sm:$0xf]
        %v633 = vld [vmem:[%s382 + $0xe8] sm:$0xf]
        %v634 = vld [vmem:[%s382 + $0xec] sm:$0xf]
        %v635 = vld [vmem:[%s382 + $0xf0] sm:$0xf]
        %v636 = vld [vmem:[%s382 + $0xf4] sm:$0xf]
        %v637 = vld [vmem:[%s382 + $0xf8] sm:$0xf]
        %v638 = vld [vmem:[%s382 + $0xfc] sm:$0xf]
        %v703 = vunpack.c.l.b16 %v575
        %v704 = vunpack.c.l.b16 %v576
        %v705 = vunpack.c.l.b16 %v577
        %v706 = vunpack.c.l.b16 %v578
        %v707 = vunpack.c.l.b16 %v579
        %v708 = vunpack.c.l.b16 %v580
        %v709 = vunpack.c.l.b16 %v581
        %v710 = vunpack.c.l.b16 %v582
        %v711 = vunpack.c.l.b16 %v583
        %v712 = vunpack.c.l.b16 %v584
        %v713 = vunpack.c.l.b16 %v585
        %v714 = vunpack.c.l.b16 %v586
        %v715 = vunpack.c.l.b16 %v587
        %v716 = vunpack.c.l.b16 %v588
        %v717 = vunpack.c.l.b16 %v589
        %v718 = vunpack.c.l.b16 %v590
        %v719 = vunpack.c.l.b16 %v591
        %v720 = vunpack.c.l.b16 %v592
        %v721 = vunpack.c.l.b16 %v593
        %v722 = vunpack.c.l.b16 %v594
        %v723 = vunpack.c.l.b16 %v595
        %v724 = vunpack.c.l.b16 %v596
        %v725 = vunpack.c.l.b16 %v597
        %v726 = vunpack.c.l.b16 %v598
        %v727 = vunpack.c.l.b16 %v599
        %v728 = vunpack.c.l.b16 %v600
        %v729 = vunpack.c.l.b16 %v601
        %v730 = vunpack.c.l.b16 %v602
        %v731 = vunpack.c.l.b16 %v603
        %v732 = vunpack.c.l.b16 %v604
        %v733 = vunpack.c.l.b16 %v605
        %v734 = vunpack.c.l.b16 %v606
        %v735 = vunpack.c.l.b16 %v607
        %v736 = vunpack.c.l.b16 %v608
        %v737 = vunpack.c.l.b16 %v609
        %v738 = vunpack.c.l.b16 %v610
        %v739 = vunpack.c.l.b16 %v611
        %v740 = vunpack.c.l.b16 %v612
        %v741 = vunpack.c.l.b16 %v613
        %v742 = vunpack.c.l.b16 %v614
        %v743 = vunpack.c.l.b16 %v615
        %v744 = vunpack.c.l.b16 %v616
        %v745 = vunpack.c.l.b16 %v617
        %v746 = vunpack.c.l.b16 %v618
        %v747 = vunpack.c.l.b16 %v619
        %v748 = vunpack.c.l.b16 %v620
        %v749 = vunpack.c.l.b16 %v621
        %v750 = vunpack.c.l.b16 %v622
        %v751 = vunpack.c.l.b16 %v623
        %v752 = vunpack.c.l.b16 %v624
        %v753 = vunpack.c.l.b16 %v625
        %v754 = vunpack.c.l.b16 %v626
        %v755 = vunpack.c.l.b16 %v627
        %v756 = vunpack.c.l.b16 %v628
        %v757 = vunpack.c.l.b16 %v629
        %v758 = vunpack.c.l.b16 %v630
        %v759 = vunpack.c.l.b16 %v631
        %v760 = vunpack.c.l.b16 %v632
        %v761 = vunpack.c.l.b16 %v633
        %v762 = vunpack.c.l.b16 %v634
        %v763 = vunpack.c.l.b16 %v635
        %v764 = vunpack.c.l.b16 %v636
        %v765 = vunpack.c.l.b16 %v637
        %v766 = vunpack.c.l.b16 %v638
        %v767 = vpack.c.b16 %v704, %v703
        %v768 = vpack.c.b16 %v706, %v705
        %v769 = vpack.c.b16 %v708, %v707
        %v770 = vpack.c.b16 %v710, %v709
        %v771 = vpack.c.b16 %v712, %v711
        %v772 = vpack.c.b16 %v714, %v713
        %v773 = vpack.c.b16 %v716, %v715
        %v774 = vpack.c.b16 %v718, %v717
        %v775 = vpack.c.b16 %v720, %v719
        %v776 = vpack.c.b16 %v722, %v721
        %v777 = vpack.c.b16 %v724, %v723
        %v778 = vpack.c.b16 %v726, %v725
        %v779 = vpack.c.b16 %v728, %v727
        %v780 = vpack.c.b16 %v730, %v729
        %v781 = vpack.c.b16 %v732, %v731
        %v782 = vpack.c.b16 %v734, %v733
        %v783 = vpack.c.b16 %v736, %v735
        %v784 = vpack.c.b16 %v738, %v737
        %v785 = vpack.c.b16 %v740, %v739
        %v786 = vpack.c.b16 %v742, %v741
        %v787 = vpack.c.b16 %v744, %v743
        %v788 = vpack.c.b16 %v746, %v745
        %v789 = vpack.c.b16 %v748, %v747
        %v790 = vpack.c.b16 %v750, %v749
        %v791 = vpack.c.b16 %v752, %v751
        %v792 = vpack.c.b16 %v754, %v753
        %v793 = vpack.c.b16 %v756, %v755
        %v794 = vpack.c.b16 %v758, %v757
        %v795 = vpack.c.b16 %v760, %v759
        %v796 = vpack.c.b16 %v762, %v761
        %v797 = vpack.c.b16 %v764, %v763
        %v798 = vpack.c.b16 %v766, %v765
        %831 = vmatprep.subr.bf16.mxu0 0
        %832 = vmatpush1.bf16.msra.mxu0 %v774
        %833 = vmatprep.subr.bf16.mxu0 0
        %834 = vmatpush1.bf16.msra.mxu0 %v773
        %835 = vmatprep.subr.bf16.mxu0 0
        %836 = vmatpush1.bf16.msra.mxu0 %v772
        %837 = vmatprep.subr.bf16.mxu0 0
        %838 = vmatpush1.bf16.msra.mxu0 %v771
        %839 = vmatprep.subr.bf16.mxu0 0
        %840 = vmatpush1.bf16.msra.mxu0 %v770
        %841 = vmatprep.subr.bf16.mxu0 0
        %842 = vmatpush1.bf16.msra.mxu0 %v769
        %843 = vmatprep.subr.bf16.mxu0 0
        %844 = vmatpush1.bf16.msra.mxu0 %v768
        %845 = vmatprep.subr.bf16.mxu0 0
        %846 = vmatpush1.bf16.msra.mxu0 %v767
        %847 = vmatprep.subr.bf16.mxu0 0
        %848 = vmatpush2.bf16.msra.mxu0 %v782
        %849 = vmatprep.subr.bf16.mxu0 0
        %850 = vmatpush2.bf16.msra.mxu0 %v781
        %851 = vmatprep.subr.bf16.mxu0 0
        %852 = vmatpush2.bf16.msra.mxu0 %v780
        %853 = vmatprep.subr.bf16.mxu0 0
        %854 = vmatpush2.bf16.msra.mxu0 %v779
        %855 = vmatprep.subr.bf16.mxu0 0
        %856 = vmatpush2.bf16.msra.mxu0 %v778
        %857 = vmatprep.subr.bf16.mxu0 0
        %858 = vmatpush2.bf16.msra.mxu0 %v777
        %859 = vmatprep.subr.bf16.mxu0 0
        %860 = vmatpush2.bf16.msra.mxu0 %v776
        %861 = vmatprep.subr.bf16.mxu0 0
        %862 = vmatpush2.bf16.msra.mxu0 %v775
        %863 = vmatprep.mubr.bf16.mxu0 %v572
        %864 = vmatmul.mubr.bf16.gmra.mxu0 %v571
        %v865 = vpop.f32.mrf.mxu0
        %v866 = vadd.f32 0.0, %v865
        %v867 = vpop.f32.mrf.mxu0
        %v868 = vpop.f32.mrf.mxu0
        %v869 = vadd.f32 0.0, %v868
        %v870 = vpop.f32.mrf.mxu0
        %871 = vdwg.mxu0
        %872 = vmatprep.subr.bf16.mxu0 0
        %873 = vmatpush1.bf16.msra.mxu0 %v790
        %874 = vmatprep.subr.bf16.mxu0 0
        %875 = vmatpush1.bf16.msra.mxu0 %v789
        %876 = vmatprep.subr.bf16.mxu0 0
        %877 = vmatpush1.bf16.msra.mxu0 %v788
        %878 = vmatprep.subr.bf16.mxu0 0
        %879 = vmatpush1.bf16.msra.mxu0 %v787
        %880 = vmatprep.subr.bf16.mxu0 0
        %881 = vmatpush1.bf16.msra.mxu0 %v786
        %882 = vmatprep.subr.bf16.mxu0 0
        %883 = vmatpush1.bf16.msra.mxu0 %v785
        %884 = vmatprep.subr.bf16.mxu0 0
        %885 = vmatpush1.bf16.msra.mxu0 %v784
        %886 = vmatprep.subr.bf16.mxu0 0
        %887 = vmatpush1.bf16.msra.mxu0 %v783
        %888 = vmatprep.subr.bf16.mxu0 0
        %889 = vmatpush2.bf16.msra.mxu0 %v798
        %890 = vmatprep.subr.bf16.mxu0 0
        %891 = vmatpush2.bf16.msra.mxu0 %v797
        %892 = vmatprep.subr.bf16.mxu0 0
        %893 = vmatpush2.bf16.msra.mxu0 %v796
        %894 = vmatprep.subr.bf16.mxu0 0
        %895 = vmatpush2.bf16.msra.mxu0 %v795
        %896 = vmatprep.subr.bf16.mxu0 0
        %897 = vmatpush2.bf16.msra.mxu0 %v794
        %898 = vmatprep.subr.bf16.mxu0 0
        %899 = vmatpush2.bf16.msra.mxu0 %v793
        %900 = vmatprep.subr.bf16.mxu0 0
        %901 = vmatpush2.bf16.msra.mxu0 %v792
        %902 = vmatprep.subr.bf16.mxu0 0
        %903 = vmatpush2.bf16.msra.mxu0 %v791
        %904 = vmatprep.mubr.bf16.mxu0 %v574
        %905 = vmatmul.mubr.bf16.gmra.mxu0 %v573
        %v906 = vpop.f32.mrf.mxu0
        %v907 = vadd.f32 %v866, %v906
        %v908 = vpop.f32.mrf.mxu0
        %v909 = vpop.f32.mrf.mxu0
        %v910 = vadd.f32 %v869, %v909
        %v911 = vpop.f32.mrf.mxu0
        %912 = vdwg.mxu0
        %v913 = vadd.f32 %v569, %v907
        %v914 = vadd.f32 %v570, %v910
        %915 = vst.msk [vmem:[#allocation2] sm:$0xff] %vm471, %v913
        %916 = vst.msk [vmem:[#allocation2 + $0x8] sm:$0xff] %vm471, %v914
        %p917 = scmp.eq.s32.totalorder %s23, 3
        // Predicated region
        $region76: #{transformer_predictor_forward.8} parent=66 // pred_check
          %p918 = pneg %p917
        $region77: #{transformer_predictor_forward.8} parent=66 // pred_check_branch
          %920 = sbr.rel (%p918) target = $region79
        $region78: #{transformer_predictor_forward.8} parent=66 // pred_region
          %v921 = vld [vmem:[#allocation2] sm:$0xff]
          %v922 = vld [vmem:[#allocation2 + $0x8] sm:$0xff]
          %v923 = vadd.f32 %v398, %v921
          %v924 = vadd.f32 %v399, %v922
          %v925 = vld [vmem:[%s4] sm:$0x1]
          %v927 = vlaneseq
          %v928 = vshrl.u32 %v927, 7
          %v929 = vsub.s32 0, %v928
          %v930 = vrot.slane %v925, %v929
          %v932 = vadd.f32 %v923, %v930
          %v933 = vadd.f32 %v924, %v930
          %v934 = vsel %vm471, %v932, 0.0
          %935 = vadd.xlane.f32.xlu0 %v934
          %v936 = vpop.xlane.xlu0 %935
          %v937 = vsel %vm471, %v933, 0.0
          %938 = vadd.xlane.f32.xlu0 %v937
          %v939 = vpop.xlane.xlu0 %938
          %v940 = vrcp.pop 32.0
          %v941 = vmul.f32 %v936, %v940
          %v942 = vmul.f32 %v939, %v940
          %v943 = vsub.f32 %v932, %v941
          %v944 = vsub.f32 %v933, %v942
          %v945 = vmul.f32 %v943, %v943
          %v946 = vmul.f32 %v944, %v944
          %v947 = vsel %vm471, %v945, 0.0
          %948 = vadd.xlane.f32.xlu0 %v947
          %v949 = vpop.xlane.xlu0 %948
          %v950 = vsel %vm471, %v946, 0.0
          %951 = vadd.xlane.f32.xlu0 %v950
          %v952 = vpop.xlane.xlu0 %951
          %v953 = vmul.f32 %v949, %v940
          %v954 = vmul.f32 %v952, %v940
          %v955 = vadd.f32 %v953, 1e-05
          %v956 = vadd.f32 %v954, 1e-05
          %v957 = vrsqrt.pop %v955
          %v958 = vrsqrt.pop %v956
          %v959 = vmul.f32 %v943, %v957
          %v960 = vmul.f32 %v944, %v958
          %v961 = vld [vmem:[%s5] sm:$0x1]
          %v963 = vlaneseq
          %v964 = vshrl.u32 %v963, 7
          %v965 = vsub.s32 0, %v964
          %v966 = vrot.slane %v961, %v965
          %v968 = vmul.f32 %v959, %v966
          %v969 = vmul.f32 %v960, %v966
          %v970 = vld [vmem:[%s6] sm:$0x1]
          %v972 = vlaneseq
          %v973 = vshrl.u32 %v972, 7
          %v974 = vsub.s32 0, %v973
          %v975 = vrot.slane %v970, %v974
          %v977 = vadd.f32 %v968, %v975
          %v978 = vadd.f32 %v969, %v975
          %979 = vst.msk [vmem:[%s388] sm:$0xff] %vm471, %v977
          %980 = vst.msk [vmem:[%s388 + $0x8] sm:$0xff] %vm471, %v978
        $region79: #{transformer_predictor_forward.8} parent=66 // pred_fallthru
          _
        %s981 = smul.u32 2, %s22
        %p982 = scmp.lt.s32.totalorder %s981, 1
        %s983 = scalar_select %p982, %s981, 1
        %s984 = smul.addr %s983, 8
        %s985 = scalar_lea.vmem %s7, %s984
        // Predicated region
        $region80: #{transformer_predictor_forward.8} parent=66 // pred_check
          %p986 = pneg %p215
        $region81: #{transformer_predictor_forward.8} parent=66 // pred_check_branch
          %988 = sbr.rel (%p986) target = $region83
        $region82: #{transformer_predictor_forward.8} parent=66 // pred_region
          %s989 = smul.u32 2, %s22
        $region83: #{transformer_predictor_forward.8} parent=66 // pred_fallthru
          _
        // Predicated region
        $region84: #{transformer_predictor_forward.8} parent=66 // pred_check
          %p990 = pneg %p215
        $region85: #{transformer_predictor_forward.8} parent=66 // pred_check_branch
          %992 = sbr.rel (%p990) target = $region87
        $region86: #{transformer_predictor_forward.8} parent=66 // pred_region
          %s993 = smul.u32 2, %s22
          %p994 = scmp.lt.s32.totalorder %s993, 1
          %s995 = scalar_select %p994, %s993, 1
          %s996 = smul.addr %s995, 8
          %s997 = scalar_lea.vmem %s7, %s996
        $region87: #{transformer_predictor_forward.8} parent=66 // pred_fallthru
          _
      $region67: #{transformer_predictor_forward.8} parent=5 // pred_fallthru
        _
      %p998 = scmp.le.s32.totalorder 2, %s13
      // Predicated region
      $region88: #{transformer_predictor_forward.8} parent=5 // pred_check
        %p999 = pneg %p998
      $region89: #{transformer_predictor_forward.8} parent=5 // pred_check_branch
        %1001 = sbr.rel (%p999) target = $region91
      $region90: #{transformer_predictor_forward.8} parent=5 // pred_region
        %s1002 = ssub.s32 %s13, 2
      $region91: #{transformer_predictor_forward.8} parent=5 // pred_fallthru
        _
    $region6: #{transformer_predictor_forward.8} parent=1 // loop_footer
      %s17 = sadd.s32 1, %s13
    $region7: #{transformer_predictor_forward.8} parent=1 // loop_footer_branch
      %12 = sbr.rel target = $region3
    $region8: #{transformer_predictor_forward.8} parent=1 // loop_exit
      _

// kernel: transformer_predictor_forward.11
$region0: #{transformer_predictor_forward.11}
  #allocation0 [shape = 'u32[]', space=smem, size = 0x4, offset = 0x4, fixed_abs, tag = 'smem constant byte address 0x4 - core index']
  #allocation1 [shape = 'u32[144,128]{1,0:T(1,128)}', space=vmem, size = 0x12000, scoped, tag = 'internal scratch']
  %s0 = inlined_call_operand.vmem [shape: f32[16,32], index: 0, kind: input, shape index: {}]
  %s1 = inlined_call_operand.vmem [shape: bf16[32,128], index: 1, kind: input, shape index: {}]
  %s2 = inlined_call_operand.vmem [shape: f32[1,128], index: 2, kind: input, shape index: {}]
  %s3 = inlined_call_operand.vmem [shape: f32[16,128], index: 3, kind: output, shape index: {}]
  %s4 = sld [smem:[#allocation0]]
  $region22: #{transformer_predictor_forward.11} parent=0
    _
  %s6 = ssub.s32 1, %s4
  %s7 = scalar_select 0, %s6, %s4
  // Predicated region
  $region2: #{transformer_predictor_forward.11} parent=0 // pred_check
    _
  $region3: #{transformer_predictor_forward.11} parent=0 // pred_check_branch
    %9 = sbr.rel (0) target = $region5
  $region4: #{transformer_predictor_forward.11} parent=0 // pred_region
    _
  $region5: #{transformer_predictor_forward.11} parent=0 // pred_fallthru
    _
  // Predicated region
  $region6: #{transformer_predictor_forward.11} parent=0 // pred_check
    _
  $region7: #{transformer_predictor_forward.11} parent=0 // pred_check_branch
    %11 = sbr.rel (0) target = $region9
  $region8: #{transformer_predictor_forward.11} parent=0 // pred_region
    _
  $region9: #{transformer_predictor_forward.11} parent=0 // pred_fallthru
    _
  // Predicated region
  $region10: #{transformer_predictor_forward.11} parent=0 // pred_check
    _
  $region11: #{transformer_predictor_forward.11} parent=0 // pred_check_branch
    %13 = sbr.rel (0) target = $region13
  $region12: #{transformer_predictor_forward.11} parent=0 // pred_region
    _
  $region13: #{transformer_predictor_forward.11} parent=0 // pred_fallthru
    _
  %v15 = vld [vmem:[%s0] sm:$0xff]
  %v16 = vld [vmem:[%s0 + $0x8] sm:$0xff]
  %v17 = vpack.c.bf16 %v16, %v15
  %v18 = vld [vmem:[%s1] sm:$0xf]
  %v19 = vld [vmem:[%s1 + $0x4] sm:$0xf]
  %v20 = vld [vmem:[%s1 + $0x8] sm:$0xf]
  %v21 = vld [vmem:[%s1 + $0xc] sm:$0xf]
  %v22 = vld [vmem:[%s2] sm:$0x1]
  %v24 = vlaneseq
  %v25 = vshrl.u32 %v24, 7
  %v26 = vsub.s32 0, %v25
  %v27 = vrot.slane %v22, %v26
  %v33 = vunpack.c.l.b16 %v18
  %v34 = vunpack.c.l.b16 %v19
  %v35 = vunpack.c.l.b16 %v20
  %v36 = vunpack.c.l.b16 %v21
  %v37 = vpack.c.b16 %v34, %v33
  %v38 = vpack.c.b16 %v36, %v35
  %vm41 = vcmask 261120
  %v43 = vsel %vm41, %v17, 0
  %45 = vmatprep.subr.bf16.mxu0 0
  %46 = vmatpush1.bf16.msra.mxu0 0
  %47 = vmatprep.subr.bf16.mxu0 0
  %48 = vmatpush1.bf16.msra.mxu0 0
  %49 = vmatprep.subr.bf16.mxu0 0
  %50 = vmatpush1.bf16.msra.mxu0 0
  %51 = vmatprep.subr.bf16.mxu0 0
  %52 = vmatpush1.bf16.msra.mxu0 0
  %53 = vmatprep.subr.bf16.mxu0 0
  %54 = vmatpush1.bf16.msra.mxu0 0
  %55 = vmatprep.subr.bf16.mxu0 0
  %56 = vmatpush1.bf16.msra.mxu0 0
  %57 = vmatprep.subr.bf16.mxu0 0
  %58 = vmatpush1.bf16.msra.mxu0 %v38
  %59 = vmatprep.subr.bf16.mxu0 0
  %60 = vmatpush1.bf16.msra.mxu0 %v37
  %61 = vmatprep.subr.bf16.mxu0 0
  %62 = vmatpush2.bf16.msra.mxu0 0
  %63 = vmatprep.subr.bf16.mxu0 0
  %64 = vmatpush2.bf16.msra.mxu0 0
  %65 = vmatprep.subr.bf16.mxu0 0
  %66 = vmatpush2.bf16.msra.mxu0 0
  %67 = vmatprep.subr.bf16.mxu0 0
  %68 = vmatpush2.bf16.msra.mxu0 0
  %69 = vmatprep.subr.bf16.mxu0 0
  %70 = vmatpush2.bf16.msra.mxu0 0
  %71 = vmatprep.subr.bf16.mxu0 0
  %72 = vmatpush2.bf16.msra.mxu0 0
  %73 = vmatprep.subr.bf16.mxu0 0
  %74 = vmatpush2.bf16.msra.mxu0 0
  %75 = vmatprep.subr.bf16.mxu0 0
  %76 = vmatpush2.bf16.msra.mxu0 0
  %77 = vmatprep.mubr.bf16.mxu0 0
  %78 = vmatmul.mubr.bf16.gmra.mxu0 %v43
  %v79 = vpop.f32.mrf.mxu0
  %v80 = vadd.f32 %v27, %v79
  %v81 = vpop.f32.mrf.mxu0
  %v82 = vpop.f32.mrf.mxu0
  %v83 = vadd.f32 %v27, %v82
  %v84 = vpop.f32.mrf.mxu0
  %85 = vdwg.mxu0
  %86 = vst [vmem:[%s3] sm:$0xff] %v80
  %87 = vst [vmem:[%s3 + $0x8] sm:$0xff] %v83
  // Predicated region
  $region14: #{transformer_predictor_forward.11} parent=0 // pred_check
    _
  $region15: #{transformer_predictor_forward.11} parent=0 // pred_check_branch
    %89 = sbr.rel (0) target = $region17
  $region16: #{transformer_predictor_forward.11} parent=0 // pred_region
    _
  $region17: #{transformer_predictor_forward.11} parent=0 // pred_fallthru
    _
  // Predicated region
  $region18: #{transformer_predictor_forward.11} parent=0 // pred_check
    _
  $region19: #{transformer_predictor_forward.11} parent=0 // pred_check_branch
    %91 = sbr.rel (0) target = $region21
  $region20: #{transformer_predictor_forward.11} parent=0 // pred_region
    _
  $region21: #{transformer_predictor_forward.11} parent=0 // pred_fallthru
    _

</llo_original>
